<compile_context>
chip_gen: v7x
topology: tpu7x:2x2x1
jax: 0.10.0
libtpu: 0.0.40
codegen_flags: <defaults>
</compile_context>

<pallas_src>
import math

import jax
import jax.numpy as jnp
from jax.experimental import pallas as pl
from jax.experimental.pallas import tpu as pltpu


def _round_up(v, m):
    return ((v + m - 1) // m) * m


def _level_params(height, width_quirk, w_act, level):
    """Static per-level pooling geometry (mirrors the torch code)."""
    hk = int(math.ceil(height / level))
    wk = int(math.ceil(width_quirk / level))
    h_pad0 = int(math.floor((hk * level - height) / 2))
    h_pad1 = int(math.ceil((hk * level - height) / 2))
    w_pad0 = int(math.floor((wk * level - width_quirk) / 2))
    w_pad1 = int(math.ceil((wk * level - width_quirk) / 2))
    hp = height + h_pad0 + h_pad1          # padded H (pads computed from H)
    wp = w_act + w_pad0 + w_pad1           # padded W uses the *actual* width
    out_h = (hp - hk) // hk + 1            # MaxPool2d floor mode, stride==kernel
    out_w = (wp - wk) // wk + 1
    return dict(hk=hk, wk=wk, h_pad0=h_pad0, w_pad0=w_pad0,
                out_h=out_h, out_w=out_w)


def _pick_nc_tile(nc, hw, w_act, itemsize, budget_bytes):
    """Largest 128-multiple divisor of NC whose input block fits the budget.

    Also capped so the widest (level-1) window keeps <= ~32 vregs live, and
    prefers >= 2 grid steps when NC >= 256 (v7x has two TensorCores).
    Returns None if NC has no 128-multiple divisor.
    """
    hw_lanes = _round_up(hw, 128)
    live_cap = max(128, (128 << 10) // max(1, w_act * itemsize))
    divisors = [d for d in range(128, nc + 1, 128) if nc % d == 0]
    if not divisors:
        return None
    ok = [d for d in divisors
          if d * hw_lanes * itemsize <= budget_bytes and d <= live_cap]
    cands = ok if ok else [min(divisors)]
    if nc >= 256:
        multi = [d for d in cands if nc // d >= 2]
        if multi:
            cands = multi
    return max(cands)


def _emit_pool_levels(read_row, o_refs, params, h_act, w_act, nc_t, out_dtype):
    """Max-pool every pyramid level from an HWNC-layout source.

    read_row(r, c0, c1) returns columns [c0, c1) of input row r as a
    (c1 - c0, nc_t) array with N*C on the lane axis.  All window geometry is
    static; each window is a tree of elementwise (VPU) maxima over its own row
    slices plus one short sublane reduce, then a lane-dense single-row store.
    """
    for o_ref, lp in zip(o_refs, params):
        hk, wk = lp["hk"], lp["wk"]
        h_pad0, w_pad0 = lp["h_pad0"], lp["w_pad0"]
        out_h, out_w = lp["out_h"], lp["out_w"]
        for i in range(out_h):
            r0 = i * hk - h_pad0
            r1 = r0 + hk
            r0v, r1v = max(r0, 0), min(r1, h_act)
            row_pad = (r0 < 0) or (r1 > h_act)
            for j in range(out_w):
                c0 = j * wk - w_pad0
                c1 = c0 + wk
                c0v, c1v = max(c0, 0), min(c1, w_act)
                col_pad = (c0 < 0) or (c1 > w_act)
                if r1v > r0v and c1v > c0v:
                    acc = read_row(r0v, c0v, c1v)
                    for r in range(r0v + 1, r1v):
                        acc = jnp.maximum(acc, read_row(r, c0v, c1v))
                    wmax = jnp.max(acc, axis=0)          # sublane reduce -> (nc_t,)
                    if row_pad or col_pad:
                        # zero padding participates in the max (F.pad + MaxPool)
                        wmax = jnp.maximum(wmax, 0)
                else:
                    # window lies entirely inside the zero padding
                    wmax = jnp.zeros((nc_t,), out_dtype)
                o_ref[i * out_w + j, :] = wmax.astype(out_dtype)


def _make_direct_kernel(params, h_act, w_act, hw, nc_tile, out_dtype):
    """Kernel reading a zero-copy (nc_tile, H*W) block; relayout done in VMEM."""
    n_levels = len(params)

    def kernel(x_ref, *refs):
        o_refs, xt_ref = refs[:n_levels], refs[n_levels]
        # In-kernel relayout (NC-major -> NC-on-lanes) in 128x128 chunks.
        for q0 in range(0, nc_tile, 128):
            qlen = min(128, nc_tile - q0)
            for p0 in range(0, hw, 128):
                plen = min(128, hw - p0)
                xt_ref[p0:p0 + plen, q0:q0 + qlen] = jnp.transpose(
                    x_ref[q0:q0 + qlen, p0:p0 + plen], (1, 0))

        def read_row(r, c0, c1):
            return xt_ref[r * w_act + c0: r * w_act + c1, :]

        _emit_pool_levels(read_row, o_refs, params, h_act, w_act, nc_tile,
                          out_dtype)

    return kernel


def _make_pretransposed_kernel(params, h_act, w_act, nc_tile, out_dtype):
    """Fallback kernel: input already (H*W, NC) (wrapper did the relayout)."""

    def kernel(x_ref, *o_refs):
        def read_row(r, c0, c1):
            return x_ref[r * w_act + c0: r * w_act + c1, :]

        _emit_pool_levels(read_row, o_refs, params, h_act, w_act, nc_tile,
                          out_dtype)

    return kernel


def _out_shapes_specs(params, nc_total, nc_tile, dtype):
    shapes = tuple(
        jax.ShapeDtypeStruct((lp["out_h"] * lp["out_w"], nc_total), dtype)
        for lp in params)
    specs = tuple(
        pl.BlockSpec((lp["out_h"] * lp["out_w"], nc_tile), lambda g: (0, g))
        for lp in params)
    return shapes, specs


def _cost_estimate(params, nc, hw, itemsize):
    out_elems = sum(lp["out_h"] * lp["out_w"] for lp in params) * nc
    return pl.CostEstimate(
        flops=len(params) * hw * nc,
        transcendentals=0,
        bytes_accessed=(hw * nc + out_elems) * itemsize)


def _vmem_limit(nc_tile, hw, params, itemsize, with_scratch):
    in_block = max(_round_up(nc_tile, 8) * _round_up(hw, 128),
                   _round_up(hw, 8) * _round_up(nc_tile, 128)) * itemsize
    scratch = _round_up(hw, 8) * _round_up(nc_tile, 128) * itemsize \
        if with_scratch else 0
    outs = sum(_round_up(lp["out_h"] * lp["out_w"], 8) *
               _round_up(nc_tile, 128) * itemsize for lp in params)
    est = 2 * in_block + scratch + 2 * outs + (8 << 20)
    return int(min(48 << 20, max(32 << 20, est)))


def _spp_call_direct(x_flat, nc_tile, params, h_act, w_act):
    nc, hw = x_flat.shape
    dtype = x_flat.dtype
    out_shapes, out_specs = _out_shapes_specs(params, nc, nc_tile, dtype)
    kernel = _make_direct_kernel(params, h_act, w_act, hw, nc_tile, dtype)
    return pl.pallas_call(
        kernel,
        out_shape=out_shapes,
        grid=(nc // nc_tile,),
        in_specs=[pl.BlockSpec((nc_tile, hw), lambda g: (g, 0))],
        out_specs=out_specs,
        scratch_shapes=[pltpu.VMEM((hw, nc_tile), dtype)],
        compiler_params=pltpu.CompilerParams(
            dimension_semantics=("parallel",),
            vmem_limit_bytes=_vmem_limit(nc_tile, hw, params, dtype.itemsize,
                                         True)),
        cost_estimate=_cost_estimate(params, nc, hw, dtype.itemsize),
    )(x_flat)


def _spp_call_pretransposed(xt, nc_tile, params, h_act, w_act):
    hw, nc = xt.shape
    dtype = xt.dtype
    out_shapes, out_specs = _out_shapes_specs(params, nc, nc_tile, dtype)
    kernel = _make_pretransposed_kernel(params, h_act, w_act, nc_tile, dtype)
    return pl.pallas_call(
        kernel,
        out_shape=out_shapes,
        grid=(nc // nc_tile,),
        in_specs=[pl.BlockSpec((hw, nc_tile), lambda g: (0, g))],
        out_specs=out_specs,
        compiler_params=pltpu.CompilerParams(
            dimension_semantics=("parallel",),
            vmem_limit_bytes=_vmem_limit(nc_tile, hw, params, dtype.itemsize,
                                         False)),
        cost_estimate=_cost_estimate(params, nc, hw, dtype.itemsize),
    )(xt)


def _postprocess(pooled, params, n, c, nc):
    # (out_h*out_w, N*C) -> (N, C*out_h*out_w), matching torch's out.view(B, -1)
    outs = []
    for p, lp in zip(pooled, params):
        ohw = lp["out_h"] * lp["out_w"]
        p = p[:, :nc]                       # strip lane padding if any
        outs.append(p.reshape(ohw, n, c).transpose(1, 2, 0).reshape(n, c * ohw))
    return jnp.concatenate(outs, axis=1)


def spp_forward(x, levels, *, block_budget_bytes=8 << 20,
                use_in_kernel_transpose=True):
    """Matches PyTorch SPP.forward (NCHW input -> (N, sum(C*level^2)))."""
    n, c, h_act, w_act = x.shape
    nc = n * c
    hw = h_act * w_act
    height = h_act
    width_quirk = h_act                     # torch quirk: width = x.size(2)
    params = [_level_params(height, width_quirk, w_act, lvl) for lvl in levels]
    itemsize = x.dtype.itemsize

    x_flat = x.reshape(nc, hw)              # free view of NCHW (no HBM copy)

    # ---- preferred path: zero-copy input, NC->lanes relayout inside the kernel
    if use_in_kernel_transpose:
        nc_tile = _pick_nc_tile(nc, hw, w_act, itemsize, block_budget_bytes)
        if (nc_tile is None
                and nc * _round_up(hw, 128) * itemsize <= 4 * block_budget_bytes):
            nc_tile = nc                    # small / awkward NC: single block
        if nc_tile is not None:
            try:
                pooled = jax.block_until_ready(
                    _spp_call_direct(x_flat, nc_tile, params, h_act, w_act))
            except Exception:
                pooled = None               # fall back to explicit relayout
            if pooled is not None:
                return _postprocess(pooled, params, n, c, nc)

    # ---- fallback: explicit HWNC relayout in XLA (one extra HBM pass),
    # NC padded to a lane-dense multiple of 128 when it helps.
    xt = jnp.transpose(x_flat, (1, 0))      # (H*W, N*C)
    nc_pad = nc
    if nc > 128 and nc % 128 != 0:
        nc_pad = _round_up(nc, 128)
        xt = jnp.pad(xt, ((0, 0), (0, nc_pad - nc)))
    nc_tile = _pick_nc_tile(nc_pad, hw, w_act, itemsize, block_budget_bytes)
    nc_tile = nc_tile or nc_pad
    pooled = _spp_call_pretransposed(xt, nc_tile, params, h_act, w_act)
    return _postprocess(pooled, params, n, c, nc)


def _spp_reference(x, levels):
    """Pure-jnp reference mirroring the torch code, for verification."""
    n, c, h_act, w_act = x.shape
    height = h_act
    width = h_act
    outs = []
    for level in levels:
        hk = int(math.ceil(height / level))
        wk = int(math.ceil(width / level))
        h_pad0 = int(math.floor((hk * level - height) / 2))
        h_pad1 = int(math.ceil((hk * level - height) / 2))
        w_pad0 = int(math.floor((wk * level - width) / 2))
        w_pad1 = int(math.ceil((wk * level - width) / 2))
        xp = jnp.pad(x, ((0, 0), (0, 0), (h_pad0, h_pad1), (w_pad0, w_pad1)))
        hp, wp = xp.shape[2], xp.shape[3]
        out_h = (hp - hk) // hk + 1
        out_w = (wp - wk) // wk + 1
        xr = xp[:, :, : out_h * hk, : out_w * wk].reshape(
            n, c, out_h, hk, out_w, wk)
        pooled = jnp.max(xr, axis=(3, 5))
        outs.append(pooled.reshape(n, -1))
    return jnp.concatenate(outs, axis=1)


if __name__ == "__main__":
    key = jax.random.PRNGKey(0)
    k0, k1 = jax.random.split(key)

    # Shape implied by the module: batch=2, channels=4, spatial=16.
    channels = 4
    levels = [1, 2, 4]
    x = jax.random.normal(k0, (2, channels, 16, 16), dtype=jnp.float32)
    out = jax.block_until_ready(spp_forward(x, levels))
    assert out.shape == (2, sum(channels * l * l for l in levels)), out.shape
    ref = _spp_reference(x, levels)
    assert jnp.allclose(out, ref, atol=1e-6, rtol=1e-6), "mismatch vs reference"

    # Second config: multi-block NC grid (two grid steps), 128x128 in-kernel
    # transposes, and a level (3) whose windows overlap the zero padding.
    levels2 = [1, 2, 3]
    x2 = jax.random.normal(k1, (4, 64, 16, 16), dtype=jnp.float32)
    out2 = jax.block_until_ready(spp_forward(x2, levels2))
    assert out2.shape == (4, 64 * sum(l * l for l in levels2)), out2.shape
    ref2 = _spp_reference(x2, levels2)
    assert jnp.allclose(out2, ref2, atol=1e-6, rtol=1e-6), "mismatch vs reference"

    print("KERNEL_OK")
</pallas_src>

<mosaic_0001>
module attributes {stable_mosaic.version = 11 : i64} {
  func.func @kernel(%arg0: i32, %arg1: memref<8x256xf32, #tpu.memory_space<vmem>>, %arg2: memref<1x8xf32, #tpu.memory_space<vmem>>, %arg3: memref<4x8xf32, #tpu.memory_space<vmem>>, %arg4: memref<16x8xf32, #tpu.memory_space<vmem>>, %arg5: memref<256x8xf32, #tpu.memory_space<vmem>>) attributes {dimension_semantics = [#tpu.dimension_semantics<parallel>], iteration_bounds = array<i64: 1>, scalar_prefetch = 0 : i64, scratch_operands = 1 : i64, tpu.core_type = #tpu.core_type<tc>, window_params = [{transform_indices = @transform_0, window_bounds = array<i64: 8, 256>}, {transform_indices = @transform_1, window_bounds = array<i64: 1, 8>}, {transform_indices = @transform_2, window_bounds = array<i64: 4, 8>}, {transform_indices = @transform_3, window_bounds = array<i64: 16, 8>}]} {
    %c0 = arith.constant 0 : index
    %c0_0 = arith.constant 0 : index
    %0 = vector.load %arg1[%c0, %c0_0] : memref<8x256xf32, #tpu.memory_space<vmem>>, vector<8x128xf32>
    %1 = tpu.transpose %0, [1, 0] : vector<8x128xf32> -> vector<128x8xf32>
    %c0_1 = arith.constant 0 : index
    %c0_2 = arith.constant 0 : index
    %2 = vector.load %arg5[%c0_1, %c0_2] : memref<256x8xf32, #tpu.memory_space<vmem>>, vector<128x8xf32>
    tpu.vector_store %arg5[%c0_1, %c0_2], %1 {strides = array<i32>} : memref<256x8xf32, #tpu.memory_space<vmem>>, vector<128x8xf32>,
    %c0_3 = arith.constant 0 : index
    %c128 = arith.constant 128 : index
    %3 = vector.load %arg1[%c0_3, %c128] : memref<8x256xf32, #tpu.memory_space<vmem>>, vector<8x128xf32>
    %4 = tpu.transpose %3, [1, 0] : vector<8x128xf32> -> vector<128x8xf32>
    %c128_4 = arith.constant 128 : index
    %c0_5 = arith.constant 0 : index
    %5 = vector.load %arg5[%c128_4, %c0_5] : memref<256x8xf32, #tpu.memory_space<vmem>>, vector<128x8xf32>
    tpu.vector_store %arg5[%c128_4, %c0_5], %4 {strides = array<i32>} : memref<256x8xf32, #tpu.memory_space<vmem>>, vector<128x8xf32>,
    %c0_6 = arith.constant 0 : index
    %c0_7 = arith.constant 0 : index
    %6 = vector.load %arg5[%c0_6, %c0_7] : memref<256x8xf32, #tpu.memory_space<vmem>>, vector<16x8xf32>
    %c16 = arith.constant 16 : index
    %c0_8 = arith.constant 0 : index
    %7 = vector.load %arg5[%c16, %c0_8] : memref<256x8xf32, #tpu.memory_space<vmem>>, vector<16x8xf32>
    %8 = arith.maximumf %6, %7 : vector<16x8xf32>
    %c32 = arith.constant 32 : index
    %c0_9 = arith.constant 0 : index
    %9 = vector.load %arg5[%c32, %c0_9] : memref<256x8xf32, #tpu.memory_space<vmem>>, vector<16x8xf32>
    %10 = arith.maximumf %8, %9 : vector<16x8xf32>
    %c48 = arith.constant 48 : index
    %c0_10 = arith.constant 0 : index
    %11 = vector.load %arg5[%c48, %c0_10] : memref<256x8xf32, #tpu.memory_space<vmem>>, vector<16x8xf32>
    %12 = arith.maximumf %10, %11 : vector<16x8xf32>
    %c64 = arith.constant 64 : index
    %c0_11 = arith.constant 0 : index
    %13 = vector.load %arg5[%c64, %c0_11] : memref<256x8xf32, #tpu.memory_space<vmem>>, vector<16x8xf32>
    %14 = arith.maximumf %12, %13 : vector<16x8xf32>
    %c80 = arith.constant 80 : index
    %c0_12 = arith.constant 0 : index
    %15 = vector.load %arg5[%c80, %c0_12] : memref<256x8xf32, #tpu.memory_space<vmem>>, vector<16x8xf32>
    %16 = arith.maximumf %14, %15 : vector<16x8xf32>
    %c96 = arith.constant 96 : index
    %c0_13 = arith.constant 0 : index
    %17 = vector.load %arg5[%c96, %c0_13] : memref<256x8xf32, #tpu.memory_space<vmem>>, vector<16x8xf32>
    %18 = arith.maximumf %16, %17 : vector<16x8xf32>
    %c112 = arith.constant 112 : index
    %c0_14 = arith.constant 0 : index
    %19 = vector.load %arg5[%c112, %c0_14] : memref<256x8xf32, #tpu.memory_space<vmem>>, vector<16x8xf32>
    %20 = arith.maximumf %18, %19 : vector<16x8xf32>
    %c128_15 = arith.constant 128 : index
    %c0_16 = arith.constant 0 : index
    %21 = vector.load %arg5[%c128_15, %c0_16] : memref<256x8xf32, #tpu.memory_space<vmem>>, vector<16x8xf32>
    %22 = arith.maximumf %20, %21 : vector<16x8xf32>
    %c144 = arith.constant 144 : index
    %c0_17 = arith.constant 0 : index
    %23 = vector.load %arg5[%c144, %c0_17] : memref<256x8xf32, #tpu.memory_space<vmem>>, vector<16x8xf32>
    %24 = arith.maximumf %22, %23 : vector<16x8xf32>
    %c160 = arith.constant 160 : index
    %c0_18 = arith.constant 0 : index
    %25 = vector.load %arg5[%c160, %c0_18] : memref<256x8xf32, #tpu.memory_space<vmem>>, vector<16x8xf32>
    %26 = arith.maximumf %24, %25 : vector<16x8xf32>
    %c176 = arith.constant 176 : index
    %c0_19 = arith.constant 0 : index
    %27 = vector.load %arg5[%c176, %c0_19] : memref<256x8xf32, #tpu.memory_space<vmem>>, vector<16x8xf32>
    %28 = arith.maximumf %26, %27 : vector<16x8xf32>
    %c192 = arith.constant 192 : index
    %c0_20 = arith.constant 0 : index
    %29 = vector.load %arg5[%c192, %c0_20] : memref<256x8xf32, #tpu.memory_space<vmem>>, vector<16x8xf32>
    %30 = arith.maximumf %28, %29 : vector<16x8xf32>
    %c208 = arith.constant 208 : index
    %c0_21 = arith.constant 0 : index
    %31 = vector.load %arg5[%c208, %c0_21] : memref<256x8xf32, #tpu.memory_space<vmem>>, vector<16x8xf32>
    %32 = arith.maximumf %30, %31 : vector<16x8xf32>
    %c224 = arith.constant 224 : index
    %c0_22 = arith.constant 0 : index
    %33 = vector.load %arg5[%c224, %c0_22] : memref<256x8xf32, #tpu.memory_space<vmem>>, vector<16x8xf32>
    %34 = arith.maximumf %32, %33 : vector<16x8xf32>
    %c240 = arith.constant 240 : index
    %c0_23 = arith.constant 0 : index
    %35 = vector.load %arg5[%c240, %c0_23] : memref<256x8xf32, #tpu.memory_space<vmem>>, vector<16x8xf32>
    %36 = arith.maximumf %34, %35 : vector<16x8xf32>
    %cst = arith.constant dense<0xFF800000> : vector<8xf32>
    %37 = vector.multi_reduction <maximumf>, %36, %cst [0] : vector<16x8xf32> to vector<8xf32>
    %c0_24 = arith.constant 0 : index
    %c0_25 = arith.constant 0 : index
    %38 = vector.load %arg2[%c0_24, %c0_25] : memref<1x8xf32, #tpu.memory_space<vmem>>, vector<1x8xf32>
    %39 = vector.shape_cast %38 : vector<1x8xf32> to vector<8xf32>
    %40 = vector.shape_cast %37 : vector<8xf32> to vector<1x8xf32>
    tpu.vector_store %arg2[%c0_24, %c0_25], %40 {strides = array<i32>} : memref<1x8xf32, #tpu.memory_space<vmem>>, vector<1x8xf32>,
    %c0_26 = arith.constant 0 : index
    %c0_27 = arith.constant 0 : index
    %41 = vector.load %arg5[%c0_26, %c0_27] : memref<256x8xf32, #tpu.memory_space<vmem>>, vector<8x8xf32>
    %c16_28 = arith.constant 16 : index
    %c0_29 = arith.constant 0 : index
    %42 = vector.load %arg5[%c16_28, %c0_29] : memref<256x8xf32, #tpu.memory_space<vmem>>, vector<8x8xf32>
    %43 = arith.maximumf %41, %42 : vector<8x8xf32>
    %c32_30 = arith.constant 32 : index
    %c0_31 = arith.constant 0 : index
    %44 = vector.load %arg5[%c32_30, %c0_31] : memref<256x8xf32, #tpu.memory_space<vmem>>, vector<8x8xf32>
    %45 = arith.maximumf %43, %44 : vector<8x8xf32>
    %c48_32 = arith.constant 48 : index
    %c0_33 = arith.constant 0 : index
    %46 = vector.load %arg5[%c48_32, %c0_33] : memref<256x8xf32, #tpu.memory_space<vmem>>, vector<8x8xf32>
    %47 = arith.maximumf %45, %46 : vector<8x8xf32>
    %c64_34 = arith.constant 64 : index
    %c0_35 = arith.constant 0 : index
    %48 = vector.load %arg5[%c64_34, %c0_35] : memref<256x8xf32, #tpu.memory_space<vmem>>, vector<8x8xf32>
    %49 = arith.maximumf %47, %48 : vector<8x8xf32>
    %c80_36 = arith.constant 80 : index
    %c0_37 = arith.constant 0 : index
    %50 = vector.load %arg5[%c80_36, %c0_37] : memref<256x8xf32, #tpu.memory_space<vmem>>, vector<8x8xf32>
    %51 = arith.maximumf %49, %50 : vector<8x8xf32>
    %c96_38 = arith.constant 96 : index
    %c0_39 = arith.constant 0 : index
    %52 = vector.load %arg5[%c96_38, %c0_39] : memref<256x8xf32, #tpu.memory_space<vmem>>, vector<8x8xf32>
    %53 = arith.maximumf %51, %52 : vector<8x8xf32>
    %c112_40 = arith.constant 112 : index
    %c0_41 = arith.constant 0 : index
    %54 = vector.load %arg5[%c112_40, %c0_41] : memref<256x8xf32, #tpu.memory_space<vmem>>, vector<8x8xf32>
    %55 = arith.maximumf %53, %54 : vector<8x8xf32>
    %cst_42 = arith.constant dense<0xFF800000> : vector<8xf32>
    %56 = vector.multi_reduction <maximumf>, %55, %cst_42 [0] : vector<8x8xf32> to vector<8xf32>
    %c0_43 = arith.constant 0 : index
    %c0_44 = arith.constant 0 : index
    %57 = vector.load %arg3[%c0_43, %c0_44] : memref<4x8xf32, #tpu.memory_space<vmem>>, vector<1x8xf32>
    %58 = vector.shape_cast %57 : vector<1x8xf32> to vector<8xf32>
    %59 = vector.shape_cast %56 : vector<8xf32> to vector<1x8xf32>
    tpu.vector_store %arg3[%c0_43, %c0_44], %59 {strides = array<i32>} : memref<4x8xf32, #tpu.memory_space<vmem>>, vector<1x8xf32>,
    %c8 = arith.constant 8 : index
    %c0_45 = arith.constant 0 : index
    %60 = vector.load %arg5[%c8, %c0_45] : memref<256x8xf32, #tpu.memory_space<vmem>>, vector<8x8xf32>
    %c24 = arith.constant 24 : index
    %c0_46 = arith.constant 0 : index
    %61 = vector.load %arg5[%c24, %c0_46] : memref<256x8xf32, #tpu.memory_space<vmem>>, vector<8x8xf32>
    %62 = arith.maximumf %60, %61 : vector<8x8xf32>
    %c40 = arith.constant 40 : index
    %c0_47 = arith.constant 0 : index
    %63 = vector.load %arg5[%c40, %c0_47] : memref<256x8xf32, #tpu.memory_space<vmem>>, vector<8x8xf32>
    %64 = arith.maximumf %62, %63 : vector<8x8xf32>
    %c56 = arith.constant 56 : index
    %c0_48 = arith.constant 0 : index
    %65 = vector.load %arg5[%c56, %c0_48] : memref<256x8xf32, #tpu.memory_space<vmem>>, vector<8x8xf32>
    %66 = arith.maximumf %64, %65 : vector<8x8xf32>
    %c72 = arith.constant 72 : index
    %c0_49 = arith.constant 0 : index
    %67 = vector.load %arg5[%c72, %c0_49] : memref<256x8xf32, #tpu.memory_space<vmem>>, vector<8x8xf32>
    %68 = arith.maximumf %66, %67 : vector<8x8xf32>
    %c88 = arith.constant 88 : index
    %c0_50 = arith.constant 0 : index
    %69 = vector.load %arg5[%c88, %c0_50] : memref<256x8xf32, #tpu.memory_space<vmem>>, vector<8x8xf32>
    %70 = arith.maximumf %68, %69 : vector<8x8xf32>
    %c104 = arith.constant 104 : index
    %c0_51 = arith.constant 0 : index
    %71 = vector.load %arg5[%c104, %c0_51] : memref<256x8xf32, #tpu.memory_space<vmem>>, vector<8x8xf32>
    %72 = arith.maximumf %70, %71 : vector<8x8xf32>
    %c120 = arith.constant 120 : index
    %c0_52 = arith.constant 0 : index
    %73 = vector.load %arg5[%c120, %c0_52] : memref<256x8xf32, #tpu.memory_space<vmem>>, vector<8x8xf32>
    %74 = arith.maximumf %72, %73 : vector<8x8xf32>
    %cst_53 = arith.constant dense<0xFF800000> : vector<8xf32>
    %75 = vector.multi_reduction <maximumf>, %74, %cst_53 [0] : vector<8x8xf32> to vector<8xf32>
    %c1 = arith.constant 1 : index
    %c0_54 = arith.constant 0 : index
    %76 = vector.load %arg3[%c1, %c0_54] : memref<4x8xf32, #tpu.memory_space<vmem>>, vector<1x8xf32>
    %77 = vector.shape_cast %76 : vector<1x8xf32> to vector<8xf32>
    %78 = vector.shape_cast %75 : vector<8xf32> to vector<1x8xf32>
    tpu.vector_store %arg3[%c1, %c0_54], %78 {strides = array<i32>} : memref<4x8xf32, #tpu.memory_space<vmem>>, vector<1x8xf32>,
    %c128_55 = arith.constant 128 : index
    %c0_56 = arith.constant 0 : index
    %79 = vector.load %arg5[%c128_55, %c0_56] : memref<256x8xf32, #tpu.memory_space<vmem>>, vector<8x8xf32>
    %c144_57 = arith.constant 144 : index
    %c0_58 = arith.constant 0 : index
    %80 = vector.load %arg5[%c144_57, %c0_58] : memref<256x8xf32, #tpu.memory_space<vmem>>, vector<8x8xf32>
    %81 = arith.maximumf %79, %80 : vector<8x8xf32>
    %c160_59 = arith.constant 160 : index
    %c0_60 = arith.constant 0 : index
    %82 = vector.load %arg5[%c160_59, %c0_60] : memref<256x8xf32, #tpu.memory_space<vmem>>, vector<8x8xf32>
    %83 = arith.maximumf %81, %82 : vector<8x8xf32>
    %c176_61 = arith.constant 176 : index
    %c0_62 = arith.constant 0 : index
    %84 = vector.load %arg5[%c176_61, %c0_62] : memref<256x8xf32, #tpu.memory_space<vmem>>, vector<8x8xf32>
    %85 = arith.maximumf %83, %84 : vector<8x8xf32>
    %c192_63 = arith.constant 192 : index
    %c0_64 = arith.constant 0 : index
    %86 = vector.load %arg5[%c192_63, %c0_64] : memref<256x8xf32, #tpu.memory_space<vmem>>, vector<8x8xf32>
    %87 = arith.maximumf %85, %86 : vector<8x8xf32>
    %c208_65 = arith.constant 208 : index
    %c0_66 = arith.constant 0 : index
    %88 = vector.load %arg5[%c208_65, %c0_66] : memref<256x8xf32, #tpu.memory_space<vmem>>, vector<8x8xf32>
    %89 = arith.maximumf %87, %88 : vector<8x8xf32>
    %c224_67 = arith.constant 224 : index
    %c0_68 = arith.constant 0 : index
    %90 = vector.load %arg5[%c224_67, %c0_68] : memref<256x8xf32, #tpu.memory_space<vmem>>, vector<8x8xf32>
    %91 = arith.maximumf %89, %90 : vector<8x8xf32>
    %c240_69 = arith.constant 240 : index
    %c0_70 = arith.constant 0 : index
    %92 = vector.load %arg5[%c240_69, %c0_70] : memref<256x8xf32, #tpu.memory_space<vmem>>, vector<8x8xf32>
    %93 = arith.maximumf %91, %92 : vector<8x8xf32>
    %cst_71 = arith.constant dense<0xFF800000> : vector<8xf32>
    %94 = vector.multi_reduction <maximumf>, %93, %cst_71 [0] : vector<8x8xf32> to vector<8xf32>
    %c2 = arith.constant 2 : index
    %c0_72 = arith.constant 0 : index
    %95 = vector.load %arg3[%c2, %c0_72] : memref<4x8xf32, #tpu.memory_space<vmem>>, vector<1x8xf32>
    %96 = vector.shape_cast %95 : vector<1x8xf32> to vector<8xf32>
    %97 = vector.shape_cast %94 : vector<8xf32> to vector<1x8xf32>
    tpu.vector_store %arg3[%c2, %c0_72], %97 {strides = array<i32>} : memref<4x8xf32, #tpu.memory_space<vmem>>, vector<1x8xf32>,
    %c136 = arith.constant 136 : index
    %c0_73 = arith.constant 0 : index
    %98 = vector.load %arg5[%c136, %c0_73] : memref<256x8xf32, #tpu.memory_space<vmem>>, vector<8x8xf32>
    %c152 = arith.constant 152 : index
    %c0_74 = arith.constant 0 : index
    %99 = vector.load %arg5[%c152, %c0_74] : memref<256x8xf32, #tpu.memory_space<vmem>>, vector<8x8xf32>
    %100 = arith.maximumf %98, %99 : vector<8x8xf32>
    %c168 = arith.constant 168 : index
    %c0_75 = arith.constant 0 : index
    %101 = vector.load %arg5[%c168, %c0_75] : memref<256x8xf32, #tpu.memory_space<vmem>>, vector<8x8xf32>
    %102 = arith.maximumf %100, %101 : vector<8x8xf32>
    %c184 = arith.constant 184 : index
    %c0_76 = arith.constant 0 : index
    %103 = vector.load %arg5[%c184, %c0_76] : memref<256x8xf32, #tpu.memory_space<vmem>>, vector<8x8xf32>
    %104 = arith.maximumf %102, %103 : vector<8x8xf32>
    %c200 = arith.constant 200 : index
    %c0_77 = arith.constant 0 : index
    %105 = vector.load %arg5[%c200, %c0_77] : memref<256x8xf32, #tpu.memory_space<vmem>>, vector<8x8xf32>
    %106 = arith.maximumf %104, %105 : vector<8x8xf32>
    %c216 = arith.constant 216 : index
    %c0_78 = arith.constant 0 : index
    %107 = vector.load %arg5[%c216, %c0_78] : memref<256x8xf32, #tpu.memory_space<vmem>>, vector<8x8xf32>
    %108 = arith.maximumf %106, %107 : vector<8x8xf32>
    %c232 = arith.constant 232 : index
    %c0_79 = arith.constant 0 : index
    %109 = vector.load %arg5[%c232, %c0_79] : memref<256x8xf32, #tpu.memory_space<vmem>>, vector<8x8xf32>
    %110 = arith.maximumf %108, %109 : vector<8x8xf32>
    %c248 = arith.constant 248 : index
    %c0_80 = arith.constant 0 : index
    %111 = vector.load %arg5[%c248, %c0_80] : memref<256x8xf32, #tpu.memory_space<vmem>>, vector<8x8xf32>
    %112 = arith.maximumf %110, %111 : vector<8x8xf32>
    %cst_81 = arith.constant dense<0xFF800000> : vector<8xf32>
    %113 = vector.multi_reduction <maximumf>, %112, %cst_81 [0] : vector<8x8xf32> to vector<8xf32>
    %c3 = arith.constant 3 : index
    %c0_82 = arith.constant 0 : index
    %114 = vector.load %arg3[%c3, %c0_82] : memref<4x8xf32, #tpu.memory_space<vmem>>, vector<1x8xf32>
    %115 = vector.shape_cast %114 : vector<1x8xf32> to vector<8xf32>
    %116 = vector.shape_cast %113 : vector<8xf32> to vector<1x8xf32>
    tpu.vector_store %arg3[%c3, %c0_82], %116 {strides = array<i32>} : memref<4x8xf32, #tpu.memory_space<vmem>>, vector<1x8xf32>,
    %c0_83 = arith.constant 0 : index
    %c0_84 = arith.constant 0 : index
    %117 = vector.load %arg5[%c0_83, %c0_84] : memref<256x8xf32, #tpu.memory_space<vmem>>, vector<4x8xf32>
    %c16_85 = arith.constant 16 : index
    %c0_86 = arith.constant 0 : index
    %118 = vector.load %arg5[%c16_85, %c0_86] : memref<256x8xf32, #tpu.memory_space<vmem>>, vector<4x8xf32>
    %119 = arith.maximumf %117, %118 : vector<4x8xf32>
    %c32_87 = arith.constant 32 : index
    %c0_88 = arith.constant 0 : index
    %120 = vector.load %arg5[%c32_87, %c0_88] : memref<256x8xf32, #tpu.memory_space<vmem>>, vector<4x8xf32>
    %121 = arith.maximumf %119, %120 : vector<4x8xf32>
    %c48_89 = arith.constant 48 : index
    %c0_90 = arith.constant 0 : index
    %122 = vector.load %arg5[%c48_89, %c0_90] : memref<256x8xf32, #tpu.memory_space<vmem>>, vector<4x8xf32>
    %123 = arith.maximumf %121, %122 : vector<4x8xf32>
    %cst_91 = arith.constant dense<0xFF800000> : vector<8xf32>
    %124 = vector.multi_reduction <maximumf>, %123, %cst_91 [0] : vector<4x8xf32> to vector<8xf32>
    %c0_92 = arith.constant 0 : index
    %c0_93 = arith.constant 0 : index
    %125 = vector.load %arg4[%c0_92, %c0_93] : memref<16x8xf32, #tpu.memory_space<vmem>>, vector<1x8xf32>
    %126 = vector.shape_cast %125 : vector<1x8xf32> to vector<8xf32>
    %127 = vector.shape_cast %124 : vector<8xf32> to vector<1x8xf32>
    tpu.vector_store %arg4[%c0_92, %c0_93], %127 {strides = array<i32>} : memref<16x8xf32, #tpu.memory_space<vmem>>, vector<1x8xf32>,
    %c4 = arith.constant 4 : index
    %c0_94 = arith.constant 0 : index
    %128 = vector.load %arg5[%c4, %c0_94] : memref<256x8xf32, #tpu.memory_space<vmem>>, vector<4x8xf32>
    %c20 = arith.constant 20 : index
    %c0_95 = arith.constant 0 : index
    %129 = vector.load %arg5[%c20, %c0_95] : memref<256x8xf32, #tpu.memory_space<vmem>>, vector<4x8xf32>
    %130 = arith.maximumf %128, %129 : vector<4x8xf32>
    %c36 = arith.constant 36 : index
    %c0_96 = arith.constant 0 : index
    %131 = vector.load %arg5[%c36, %c0_96] : memref<256x8xf32, #tpu.memory_space<vmem>>, vector<4x8xf32>
    %132 = arith.maximumf %130, %131 : vector<4x8xf32>
    %c52 = arith.constant 52 : index
    %c0_97 = arith.constant 0 : index
    %133 = vector.load %arg5[%c52, %c0_97] : memref<256x8xf32, #tpu.memory_space<vmem>>, vector<4x8xf32>
    %134 = arith.maximumf %132, %133 : vector<4x8xf32>
    %cst_98 = arith.constant dense<0xFF800000> : vector<8xf32>
    %135 = vector.multi_reduction <maximumf>, %134, %cst_98 [0] : vector<4x8xf32> to vector<8xf32>
    %c1_99 = arith.constant 1 : index
    %c0_100 = arith.constant 0 : index
    %136 = vector.load %arg4[%c1_99, %c0_100] : memref<16x8xf32, #tpu.memory_space<vmem>>, vector<1x8xf32>
    %137 = vector.shape_cast %136 : vector<1x8xf32> to vector<8xf32>
    %138 = vector.shape_cast %135 : vector<8xf32> to vector<1x8xf32>
    tpu.vector_store %arg4[%c1_99, %c0_100], %138 {strides = array<i32>} : memref<16x8xf32, #tpu.memory_space<vmem>>, vector<1x8xf32>,
    %c8_101 = arith.constant 8 : index
    %c0_102 = arith.constant 0 : index
    %139 = vector.load %arg5[%c8_101, %c0_102] : memref<256x8xf32, #tpu.memory_space<vmem>>, vector<4x8xf32>
    %c24_103 = arith.constant 24 : index
    %c0_104 = arith.constant 0 : index
    %140 = vector.load %arg5[%c24_103, %c0_104] : memref<256x8xf32, #tpu.memory_space<vmem>>, vector<4x8xf32>
    %141 = arith.maximumf %139, %140 : vector<4x8xf32>
    %c40_105 = arith.constant 40 : index
    %c0_106 = arith.constant 0 : index
    %142 = vector.load %arg5[%c40_105, %c0_106] : memref<256x8xf32, #tpu.memory_space<vmem>>, vector<4x8xf32>
    %143 = arith.maximumf %141, %142 : vector<4x8xf32>
    %c56_107 = arith.constant 56 : index
    %c0_108 = arith.constant 0 : index
    %144 = vector.load %arg5[%c56_107, %c0_108] : memref<256x8xf32, #tpu.memory_space<vmem>>, vector<4x8xf32>
    %145 = arith.maximumf %143, %144 : vector<4x8xf32>
    %cst_109 = arith.constant dense<0xFF800000> : vector<8xf32>
    %146 = vector.multi_reduction <maximumf>, %145, %cst_109 [0] : vector<4x8xf32> to vector<8xf32>
    %c2_110 = arith.constant 2 : index
    %c0_111 = arith.constant 0 : index
    %147 = vector.load %arg4[%c2_110, %c0_111] : memref<16x8xf32, #tpu.memory_space<vmem>>, vector<1x8xf32>
    %148 = vector.shape_cast %147 : vector<1x8xf32> to vector<8xf32>
    %149 = vector.shape_cast %146 : vector<8xf32> to vector<1x8xf32>
    tpu.vector_store %arg4[%c2_110, %c0_111], %149 {strides = array<i32>} : memref<16x8xf32, #tpu.memory_space<vmem>>, vector<1x8xf32>,
    %c12 = arith.constant 12 : index
    %c0_112 = arith.constant 0 : index
    %150 = vector.load %arg5[%c12, %c0_112] : memref<256x8xf32, #tpu.memory_space<vmem>>, vector<4x8xf32>
    %c28 = arith.constant 28 : index
    %c0_113 = arith.constant 0 : index
    %151 = vector.load %arg5[%c28, %c0_113] : memref<256x8xf32, #tpu.memory_space<vmem>>, vector<4x8xf32>
    %152 = arith.maximumf %150, %151 : vector<4x8xf32>
    %c44 = arith.constant 44 : index
    %c0_114 = arith.constant 0 : index
    %153 = vector.load %arg5[%c44, %c0_114] : memref<256x8xf32, #tpu.memory_space<vmem>>, vector<4x8xf32>
    %154 = arith.maximumf %152, %153 : vector<4x8xf32>
    %c60 = arith.constant 60 : index
    %c0_115 = arith.constant 0 : index
    %155 = vector.load %arg5[%c60, %c0_115] : memref<256x8xf32, #tpu.memory_space<vmem>>, vector<4x8xf32>
    %156 = arith.maximumf %154, %155 : vector<4x8xf32>
    %cst_116 = arith.constant dense<0xFF800000> : vector<8xf32>
    %157 = vector.multi_reduction <maximumf>, %156, %cst_116 [0] : vector<4x8xf32> to vector<8xf32>
    %c3_117 = arith.constant 3 : index
    %c0_118 = arith.constant 0 : index
    %158 = vector.load %arg4[%c3_117, %c0_118] : memref<16x8xf32, #tpu.memory_space<vmem>>, vector<1x8xf32>
    %159 = vector.shape_cast %158 : vector<1x8xf32> to vector<8xf32>
    %160 = vector.shape_cast %157 : vector<8xf32> to vector<1x8xf32>
    tpu.vector_store %arg4[%c3_117, %c0_118], %160 {strides = array<i32>} : memref<16x8xf32, #tpu.memory_space<vmem>>, vector<1x8xf32>,
    %c64_119 = arith.constant 64 : index
    %c0_120 = arith.constant 0 : index
    %161 = vector.load %arg5[%c64_119, %c0_120] : memref<256x8xf32, #tpu.memory_space<vmem>>, vector<4x8xf32>
    %c80_121 = arith.constant 80 : index
    %c0_122 = arith.constant 0 : index
    %162 = vector.load %arg5[%c80_121, %c0_122] : memref<256x8xf32, #tpu.memory_space<vmem>>, vector<4x8xf32>
    %163 = arith.maximumf %161, %162 : vector<4x8xf32>
    %c96_123 = arith.constant 96 : index
    %c0_124 = arith.constant 0 : index
    %164 = vector.load %arg5[%c96_123, %c0_124] : memref<256x8xf32, #tpu.memory_space<vmem>>, vector<4x8xf32>
    %165 = arith.maximumf %163, %164 : vector<4x8xf32>
    %c112_125 = arith.constant 112 : index
    %c0_126 = arith.constant 0 : index
    %166 = vector.load %arg5[%c112_125, %c0_126] : memref<256x8xf32, #tpu.memory_space<vmem>>, vector<4x8xf32>
    %167 = arith.maximumf %165, %166 : vector<4x8xf32>
    %cst_127 = arith.constant dense<0xFF800000> : vector<8xf32>
    %168 = vector.multi_reduction <maximumf>, %167, %cst_127 [0] : vector<4x8xf32> to vector<8xf32>
    %c4_128 = arith.constant 4 : index
    %c0_129 = arith.constant 0 : index
    %169 = vector.load %arg4[%c4_128, %c0_129] : memref<16x8xf32, #tpu.memory_space<vmem>>, vector<1x8xf32>
    %170 = vector.shape_cast %169 : vector<1x8xf32> to vector<8xf32>
    %171 = vector.shape_cast %168 : vector<8xf32> to vector<1x8xf32>
    tpu.vector_store %arg4[%c4_128, %c0_129], %171 {strides = array<i32>} : memref<16x8xf32, #tpu.memory_space<vmem>>, vector<1x8xf32>,
    %c68 = arith.constant 68 : index
    %c0_130 = arith.constant 0 : index
    %172 = vector.load %arg5[%c68, %c0_130] : memref<256x8xf32, #tpu.memory_space<vmem>>, vector<4x8xf32>
    %c84 = arith.constant 84 : index
    %c0_131 = arith.constant 0 : index
    %173 = vector.load %arg5[%c84, %c0_131] : memref<256x8xf32, #tpu.memory_space<vmem>>, vector<4x8xf32>
    %174 = arith.maximumf %172, %173 : vector<4x8xf32>
    %c100 = arith.constant 100 : index
    %c0_132 = arith.constant 0 : index
    %175 = vector.load %arg5[%c100, %c0_132] : memref<256x8xf32, #tpu.memory_space<vmem>>, vector<4x8xf32>
    %176 = arith.maximumf %174, %175 : vector<4x8xf32>
    %c116 = arith.constant 116 : index
    %c0_133 = arith.constant 0 : index
    %177 = vector.load %arg5[%c116, %c0_133] : memref<256x8xf32, #tpu.memory_space<vmem>>, vector<4x8xf32>
    %178 = arith.maximumf %176, %177 : vector<4x8xf32>
    %cst_134 = arith.constant dense<0xFF800000> : vector<8xf32>
    %179 = vector.multi_reduction <maximumf>, %178, %cst_134 [0] : vector<4x8xf32> to vector<8xf32>
    %c5 = arith.constant 5 : index
    %c0_135 = arith.constant 0 : index
    %180 = vector.load %arg4[%c5, %c0_135] : memref<16x8xf32, #tpu.memory_space<vmem>>, vector<1x8xf32>
    %181 = vector.shape_cast %180 : vector<1x8xf32> to vector<8xf32>
    %182 = vector.shape_cast %179 : vector<8xf32> to vector<1x8xf32>
    tpu.vector_store %arg4[%c5, %c0_135], %182 {strides = array<i32>} : memref<16x8xf32, #tpu.memory_space<vmem>>, vector<1x8xf32>,
    %c72_136 = arith.constant 72 : index
    %c0_137 = arith.constant 0 : index
    %183 = vector.load %arg5[%c72_136, %c0_137] : memref<256x8xf32, #tpu.memory_space<vmem>>, vector<4x8xf32>
    %c88_138 = arith.constant 88 : index
    %c0_139 = arith.constant 0 : index
    %184 = vector.load %arg5[%c88_138, %c0_139] : memref<256x8xf32, #tpu.memory_space<vmem>>, vector<4x8xf32>
    %185 = arith.maximumf %183, %184 : vector<4x8xf32>
    %c104_140 = arith.constant 104 : index
    %c0_141 = arith.constant 0 : index
    %186 = vector.load %arg5[%c104_140, %c0_141] : memref<256x8xf32, #tpu.memory_space<vmem>>, vector<4x8xf32>
    %187 = arith.maximumf %185, %186 : vector<4x8xf32>
    %c120_142 = arith.constant 120 : index
    %c0_143 = arith.constant 0 : index
    %188 = vector.load %arg5[%c120_142, %c0_143] : memref<256x8xf32, #tpu.memory_space<vmem>>, vector<4x8xf32>
    %189 = arith.maximumf %187, %188 : vector<4x8xf32>
    %cst_144 = arith.constant dense<0xFF800000> : vector<8xf32>
    %190 = vector.multi_reduction <maximumf>, %189, %cst_144 [0] : vector<4x8xf32> to vector<8xf32>
    %c6 = arith.constant 6 : index
    %c0_145 = arith.constant 0 : index
    %191 = vector.load %arg4[%c6, %c0_145] : memref<16x8xf32, #tpu.memory_space<vmem>>, vector<1x8xf32>
    %192 = vector.shape_cast %191 : vector<1x8xf32> to vector<8xf32>
    %193 = vector.shape_cast %190 : vector<8xf32> to vector<1x8xf32>
    tpu.vector_store %arg4[%c6, %c0_145], %193 {strides = array<i32>} : memref<16x8xf32, #tpu.memory_space<vmem>>, vector<1x8xf32>,
    %c76 = arith.constant 76 : index
    %c0_146 = arith.constant 0 : index
    %194 = vector.load %arg5[%c76, %c0_146] : memref<256x8xf32, #tpu.memory_space<vmem>>, vector<4x8xf32>
    %c92 = arith.constant 92 : index
    %c0_147 = arith.constant 0 : index
    %195 = vector.load %arg5[%c92, %c0_147] : memref<256x8xf32, #tpu.memory_space<vmem>>, vector<4x8xf32>
    %196 = arith.maximumf %194, %195 : vector<4x8xf32>
    %c108 = arith.constant 108 : index
    %c0_148 = arith.constant 0 : index
    %197 = vector.load %arg5[%c108, %c0_148] : memref<256x8xf32, #tpu.memory_space<vmem>>, vector<4x8xf32>
    %198 = arith.maximumf %196, %197 : vector<4x8xf32>
    %c124 = arith.constant 124 : index
    %c0_149 = arith.constant 0 : index
    %199 = vector.load %arg5[%c124, %c0_149] : memref<256x8xf32, #tpu.memory_space<vmem>>, vector<4x8xf32>
    %200 = arith.maximumf %198, %199 : vector<4x8xf32>
    %cst_150 = arith.constant dense<0xFF800000> : vector<8xf32>
    %201 = vector.multi_reduction <maximumf>, %200, %cst_150 [0] : vector<4x8xf32> to vector<8xf32>
    %c7 = arith.constant 7 : index
    %c0_151 = arith.constant 0 : index
    %202 = vector.load %arg4[%c7, %c0_151] : memref<16x8xf32, #tpu.memory_space<vmem>>, vector<1x8xf32>
    %203 = vector.shape_cast %202 : vector<1x8xf32> to vector<8xf32>
    %204 = vector.shape_cast %201 : vector<8xf32> to vector<1x8xf32>
    tpu.vector_store %arg4[%c7, %c0_151], %204 {strides = array<i32>} : memref<16x8xf32, #tpu.memory_space<vmem>>, vector<1x8xf32>,
    %c128_152 = arith.constant 128 : index
    %c0_153 = arith.constant 0 : index
    %205 = vector.load %arg5[%c128_152, %c0_153] : memref<256x8xf32, #tpu.memory_space<vmem>>, vector<4x8xf32>
    %c144_154 = arith.constant 144 : index
    %c0_155 = arith.constant 0 : index
    %206 = vector.load %arg5[%c144_154, %c0_155] : memref<256x8xf32, #tpu.memory_space<vmem>>, vector<4x8xf32>
    %207 = arith.maximumf %205, %206 : vector<4x8xf32>
    %c160_156 = arith.constant 160 : index
    %c0_157 = arith.constant 0 : index
    %208 = vector.load %arg5[%c160_156, %c0_157] : memref<256x8xf32, #tpu.memory_space<vmem>>, vector<4x8xf32>
    %209 = arith.maximumf %207, %208 : vector<4x8xf32>
    %c176_158 = arith.constant 176 : index
    %c0_159 = arith.constant 0 : index
    %210 = vector.load %arg5[%c176_158, %c0_159] : memref<256x8xf32, #tpu.memory_space<vmem>>, vector<4x8xf32>
    %211 = arith.maximumf %209, %210 : vector<4x8xf32>
    %cst_160 = arith.constant dense<0xFF800000> : vector<8xf32>
    %212 = vector.multi_reduction <maximumf>, %211, %cst_160 [0] : vector<4x8xf32> to vector<8xf32>
    %c8_161 = arith.constant 8 : index
    %c0_162 = arith.constant 0 : index
    %213 = vector.load %arg4[%c8_161, %c0_162] : memref<16x8xf32, #tpu.memory_space<vmem>>, vector<1x8xf32>
    %214 = vector.shape_cast %213 : vector<1x8xf32> to vector<8xf32>
    %215 = vector.shape_cast %212 : vector<8xf32> to vector<1x8xf32>
    tpu.vector_store %arg4[%c8_161, %c0_162], %215 {strides = array<i32>} : memref<16x8xf32, #tpu.memory_space<vmem>>, vector<1x8xf32>,
    %c132 = arith.constant 132 : index
    %c0_163 = arith.constant 0 : index
    %216 = vector.load %arg5[%c132, %c0_163] : memref<256x8xf32, #tpu.memory_space<vmem>>, vector<4x8xf32>
    %c148 = arith.constant 148 : index
    %c0_164 = arith.constant 0 : index
    %217 = vector.load %arg5[%c148, %c0_164] : memref<256x8xf32, #tpu.memory_space<vmem>>, vector<4x8xf32>
    %218 = arith.maximumf %216, %217 : vector<4x8xf32>
    %c164 = arith.constant 164 : index
    %c0_165 = arith.constant 0 : index
    %219 = vector.load %arg5[%c164, %c0_165] : memref<256x8xf32, #tpu.memory_space<vmem>>, vector<4x8xf32>
    %220 = arith.maximumf %218, %219 : vector<4x8xf32>
    %c180 = arith.constant 180 : index
    %c0_166 = arith.constant 0 : index
    %221 = vector.load %arg5[%c180, %c0_166] : memref<256x8xf32, #tpu.memory_space<vmem>>, vector<4x8xf32>
    %222 = arith.maximumf %220, %221 : vector<4x8xf32>
    %cst_167 = arith.constant dense<0xFF800000> : vector<8xf32>
    %223 = vector.multi_reduction <maximumf>, %222, %cst_167 [0] : vector<4x8xf32> to vector<8xf32>
    %c9 = arith.constant 9 : index
    %c0_168 = arith.constant 0 : index
    %224 = vector.load %arg4[%c9, %c0_168] : memref<16x8xf32, #tpu.memory_space<vmem>>, vector<1x8xf32>
    %225 = vector.shape_cast %224 : vector<1x8xf32> to vector<8xf32>
    %226 = vector.shape_cast %223 : vector<8xf32> to vector<1x8xf32>
    tpu.vector_store %arg4[%c9, %c0_168], %226 {strides = array<i32>} : memref<16x8xf32, #tpu.memory_space<vmem>>, vector<1x8xf32>,
    %c136_169 = arith.constant 136 : index
    %c0_170 = arith.constant 0 : index
    %227 = vector.load %arg5[%c136_169, %c0_170] : memref<256x8xf32, #tpu.memory_space<vmem>>, vector<4x8xf32>
    %c152_171 = arith.constant 152 : index
    %c0_172 = arith.constant 0 : index
    %228 = vector.load %arg5[%c152_171, %c0_172] : memref<256x8xf32, #tpu.memory_space<vmem>>, vector<4x8xf32>
    %229 = arith.maximumf %227, %228 : vector<4x8xf32>
    %c168_173 = arith.constant 168 : index
    %c0_174 = arith.constant 0 : index
    %230 = vector.load %arg5[%c168_173, %c0_174] : memref<256x8xf32, #tpu.memory_space<vmem>>, vector<4x8xf32>
    %231 = arith.maximumf %229, %230 : vector<4x8xf32>
    %c184_175 = arith.constant 184 : index
    %c0_176 = arith.constant 0 : index
    %232 = vector.load %arg5[%c184_175, %c0_176] : memref<256x8xf32, #tpu.memory_space<vmem>>, vector<4x8xf32>
    %233 = arith.maximumf %231, %232 : vector<4x8xf32>
    %cst_177 = arith.constant dense<0xFF800000> : vector<8xf32>
    %234 = vector.multi_reduction <maximumf>, %233, %cst_177 [0] : vector<4x8xf32> to vector<8xf32>
    %c10 = arith.constant 10 : index
    %c0_178 = arith.constant 0 : index
    %235 = vector.load %arg4[%c10, %c0_178] : memref<16x8xf32, #tpu.memory_space<vmem>>, vector<1x8xf32>
    %236 = vector.shape_cast %235 : vector<1x8xf32> to vector<8xf32>
    %237 = vector.shape_cast %234 : vector<8xf32> to vector<1x8xf32>
    tpu.vector_store %arg4[%c10, %c0_178], %237 {strides = array<i32>} : memref<16x8xf32, #tpu.memory_space<vmem>>, vector<1x8xf32>,
    %c140 = arith.constant 140 : index
    %c0_179 = arith.constant 0 : index
    %238 = vector.load %arg5[%c140, %c0_179] : memref<256x8xf32, #tpu.memory_space<vmem>>, vector<4x8xf32>
    %c156 = arith.constant 156 : index
    %c0_180 = arith.constant 0 : index
    %239 = vector.load %arg5[%c156, %c0_180] : memref<256x8xf32, #tpu.memory_space<vmem>>, vector<4x8xf32>
    %240 = arith.maximumf %238, %239 : vector<4x8xf32>
    %c172 = arith.constant 172 : index
    %c0_181 = arith.constant 0 : index
    %241 = vector.load %arg5[%c172, %c0_181] : memref<256x8xf32, #tpu.memory_space<vmem>>, vector<4x8xf32>
    %242 = arith.maximumf %240, %241 : vector<4x8xf32>
    %c188 = arith.constant 188 : index
    %c0_182 = arith.constant 0 : index
    %243 = vector.load %arg5[%c188, %c0_182] : memref<256x8xf32, #tpu.memory_space<vmem>>, vector<4x8xf32>
    %244 = arith.maximumf %242, %243 : vector<4x8xf32>
    %cst_183 = arith.constant dense<0xFF800000> : vector<8xf32>
    %245 = vector.multi_reduction <maximumf>, %244, %cst_183 [0] : vector<4x8xf32> to vector<8xf32>
    %c11 = arith.constant 11 : index
    %c0_184 = arith.constant 0 : index
    %246 = vector.load %arg4[%c11, %c0_184] : memref<16x8xf32, #tpu.memory_space<vmem>>, vector<1x8xf32>
    %247 = vector.shape_cast %246 : vector<1x8xf32> to vector<8xf32>
    %248 = vector.shape_cast %245 : vector<8xf32> to vector<1x8xf32>
    tpu.vector_store %arg4[%c11, %c0_184], %248 {strides = array<i32>} : memref<16x8xf32, #tpu.memory_space<vmem>>, vector<1x8xf32>,
    %c192_185 = arith.constant 192 : index
    %c0_186 = arith.constant 0 : index
    %249 = vector.load %arg5[%c192_185, %c0_186] : memref<256x8xf32, #tpu.memory_space<vmem>>, vector<4x8xf32>
    %c208_187 = arith.constant 208 : index
    %c0_188 = arith.constant 0 : index
    %250 = vector.load %arg5[%c208_187, %c0_188] : memref<256x8xf32, #tpu.memory_space<vmem>>, vector<4x8xf32>
    %251 = arith.maximumf %249, %250 : vector<4x8xf32>
    %c224_189 = arith.constant 224 : index
    %c0_190 = arith.constant 0 : index
    %252 = vector.load %arg5[%c224_189, %c0_190] : memref<256x8xf32, #tpu.memory_space<vmem>>, vector<4x8xf32>
    %253 = arith.maximumf %251, %252 : vector<4x8xf32>
    %c240_191 = arith.constant 240 : index
    %c0_192 = arith.constant 0 : index
    %254 = vector.load %arg5[%c240_191, %c0_192] : memref<256x8xf32, #tpu.memory_space<vmem>>, vector<4x8xf32>
    %255 = arith.maximumf %253, %254 : vector<4x8xf32>
    %cst_193 = arith.constant dense<0xFF800000> : vector<8xf32>
    %256 = vector.multi_reduction <maximumf>, %255, %cst_193 [0] : vector<4x8xf32> to vector<8xf32>
    %c12_194 = arith.constant 12 : index
    %c0_195 = arith.constant 0 : index
    %257 = vector.load %arg4[%c12_194, %c0_195] : memref<16x8xf32, #tpu.memory_space<vmem>>, vector<1x8xf32>
    %258 = vector.shape_cast %257 : vector<1x8xf32> to vector<8xf32>
    %259 = vector.shape_cast %256 : vector<8xf32> to vector<1x8xf32>
    tpu.vector_store %arg4[%c12_194, %c0_195], %259 {strides = array<i32>} : memref<16x8xf32, #tpu.memory_space<vmem>>, vector<1x8xf32>,
    %c196 = arith.constant 196 : index
    %c0_196 = arith.constant 0 : index
    %260 = vector.load %arg5[%c196, %c0_196] : memref<256x8xf32, #tpu.memory_space<vmem>>, vector<4x8xf32>
    %c212 = arith.constant 212 : index
    %c0_197 = arith.constant 0 : index
    %261 = vector.load %arg5[%c212, %c0_197] : memref<256x8xf32, #tpu.memory_space<vmem>>, vector<4x8xf32>
    %262 = arith.maximumf %260, %261 : vector<4x8xf32>
    %c228 = arith.constant 228 : index
    %c0_198 = arith.constant 0 : index
    %263 = vector.load %arg5[%c228, %c0_198] : memref<256x8xf32, #tpu.memory_space<vmem>>, vector<4x8xf32>
    %264 = arith.maximumf %262, %263 : vector<4x8xf32>
    %c244 = arith.constant 244 : index
    %c0_199 = arith.constant 0 : index
    %265 = vector.load %arg5[%c244, %c0_199] : memref<256x8xf32, #tpu.memory_space<vmem>>, vector<4x8xf32>
    %266 = arith.maximumf %264, %265 : vector<4x8xf32>
    %cst_200 = arith.constant dense<0xFF800000> : vector<8xf32>
    %267 = vector.multi_reduction <maximumf>, %266, %cst_200 [0] : vector<4x8xf32> to vector<8xf32>
    %c13 = arith.constant 13 : index
    %c0_201 = arith.constant 0 : index
    %268 = vector.load %arg4[%c13, %c0_201] : memref<16x8xf32, #tpu.memory_space<vmem>>, vector<1x8xf32>
    %269 = vector.shape_cast %268 : vector<1x8xf32> to vector<8xf32>
    %270 = vector.shape_cast %267 : vector<8xf32> to vector<1x8xf32>
    tpu.vector_store %arg4[%c13, %c0_201], %270 {strides = array<i32>} : memref<16x8xf32, #tpu.memory_space<vmem>>, vector<1x8xf32>,
    %c200_202 = arith.constant 200 : index
    %c0_203 = arith.constant 0 : index
    %271 = vector.load %arg5[%c200_202, %c0_203] : memref<256x8xf32, #tpu.memory_space<vmem>>, vector<4x8xf32>
    %c216_204 = arith.constant 216 : index
    %c0_205 = arith.constant 0 : index
    %272 = vector.load %arg5[%c216_204, %c0_205] : memref<256x8xf32, #tpu.memory_space<vmem>>, vector<4x8xf32>
    %273 = arith.maximumf %271, %272 : vector<4x8xf32>
    %c232_206 = arith.constant 232 : index
    %c0_207 = arith.constant 0 : index
    %274 = vector.load %arg5[%c232_206, %c0_207] : memref<256x8xf32, #tpu.memory_space<vmem>>, vector<4x8xf32>
    %275 = arith.maximumf %273, %274 : vector<4x8xf32>
    %c248_208 = arith.constant 248 : index
    %c0_209 = arith.constant 0 : index
    %276 = vector.load %arg5[%c248_208, %c0_209] : memref<256x8xf32, #tpu.memory_space<vmem>>, vector<4x8xf32>
    %277 = arith.maximumf %275, %276 : vector<4x8xf32>
    %cst_210 = arith.constant dense<0xFF800000> : vector<8xf32>
    %278 = vector.multi_reduction <maximumf>, %277, %cst_210 [0] : vector<4x8xf32> to vector<8xf32>
    %c14 = arith.constant 14 : index
    %c0_211 = arith.constant 0 : index
    %279 = vector.load %arg4[%c14, %c0_211] : memref<16x8xf32, #tpu.memory_space<vmem>>, vector<1x8xf32>
    %280 = vector.shape_cast %279 : vector<1x8xf32> to vector<8xf32>
    %281 = vector.shape_cast %278 : vector<8xf32> to vector<1x8xf32>
    tpu.vector_store %arg4[%c14, %c0_211], %281 {strides = array<i32>} : memref<16x8xf32, #tpu.memory_space<vmem>>, vector<1x8xf32>,
    %c204 = arith.constant 204 : index
    %c0_212 = arith.constant 0 : index
    %282 = vector.load %arg5[%c204, %c0_212] : memref<256x8xf32, #tpu.memory_space<vmem>>, vector<4x8xf32>
    %c220 = arith.constant 220 : index
    %c0_213 = arith.constant 0 : index
    %283 = vector.load %arg5[%c220, %c0_213] : memref<256x8xf32, #tpu.memory_space<vmem>>, vector<4x8xf32>
    %284 = arith.maximumf %282, %283 : vector<4x8xf32>
    %c236 = arith.constant 236 : index
    %c0_214 = arith.constant 0 : index
    %285 = vector.load %arg5[%c236, %c0_214] : memref<256x8xf32, #tpu.memory_space<vmem>>, vector<4x8xf32>
    %286 = arith.maximumf %284, %285 : vector<4x8xf32>
    %c252 = arith.constant 252 : index
    %c0_215 = arith.constant 0 : index
    %287 = vector.load %arg5[%c252, %c0_215] : memref<256x8xf32, #tpu.memory_space<vmem>>, vector<4x8xf32>
    %288 = arith.maximumf %286, %287 : vector<4x8xf32>
    %cst_216 = arith.constant dense<0xFF800000> : vector<8xf32>
    %289 = vector.multi_reduction <maximumf>, %288, %cst_216 [0] : vector<4x8xf32> to vector<8xf32>
    %c15 = arith.constant 15 : index
    %c0_217 = arith.constant 0 : index
    %290 = vector.load %arg4[%c15, %c0_217] : memref<16x8xf32, #tpu.memory_space<vmem>>, vector<1x8xf32>
    %291 = vector.shape_cast %290 : vector<1x8xf32> to vector<8xf32>
    %292 = vector.shape_cast %289 : vector<8xf32> to vector<1x8xf32>
    tpu.vector_store %arg4[%c15, %c0_217], %292 {strides = array<i32>} : memref<16x8xf32, #tpu.memory_space<vmem>>, vector<1x8xf32>,
    return
  }
  func.func @transform_0(%arg0: i32) -> (i32, i32) {
    %c0_i32 = arith.constant 0 : i32
    %c0_i32_0 = arith.constant 0 : i32
    return %arg0, %c0_i32 : i32, i32
  }
  func.func @transform_1(%arg0: i32) -> (i32, i32) {
    %c0_i32 = arith.constant 0 : i32
    %c0_i32_0 = arith.constant 0 : i32
    return %c0_i32, %arg0 : i32, i32
  }
  func.func @transform_2(%arg0: i32) -> (i32, i32) {
    %c0_i32 = arith.constant 0 : i32
    %c0_i32_0 = arith.constant 0 : i32
    return %c0_i32, %arg0 : i32, i32
  }
  func.func @transform_3(%arg0: i32) -> (i32, i32) {
    %c0_i32 = arith.constant 0 : i32
    %c0_i32_0 = arith.constant 0 : i32
    return %c0_i32, %arg0 : i32, i32
  }
}

module attributes {stable_mosaic.version = 11 : i64} {
  func.func @kernel(%arg0: i32, %arg1: memref<256x8xf32, #tpu.memory_space<vmem>>, %arg2: memref<1x8xf32, #tpu.memory_space<vmem>>, %arg3: memref<4x8xf32, #tpu.memory_space<vmem>>, %arg4: memref<16x8xf32, #tpu.memory_space<vmem>>) attributes {dimension_semantics = [#tpu.dimension_semantics<parallel>], iteration_bounds = array<i64: 1>, scalar_prefetch = 0 : i64, scratch_operands = 0 : i64, tpu.core_type = #tpu.core_type<tc>, window_params = [{transform_indices = @transform_0, window_bounds = array<i64: 256, 8>}, {transform_indices = @transform_1, window_bounds = array<i64: 1, 8>}, {transform_indices = @transform_2, window_bounds = array<i64: 4, 8>}, {transform_indices = @transform_3, window_bounds = array<i64: 16, 8>}]} {
    %c0 = arith.constant 0 : index
    %c0_0 = arith.constant 0 : index
    %0 = vector.load %arg1[%c0, %c0_0] : memref<256x8xf32, #tpu.memory_space<vmem>>, vector<16x8xf32>
    %c16 = arith.constant 16 : index
    %c0_1 = arith.constant 0 : index
    %1 = vector.load %arg1[%c16, %c0_1] : memref<256x8xf32, #tpu.memory_space<vmem>>, vector<16x8xf32>
    %2 = arith.maximumf %0, %1 : vector<16x8xf32>
    %c32 = arith.constant 32 : index
    %c0_2 = arith.constant 0 : index
    %3 = vector.load %arg1[%c32, %c0_2] : memref<256x8xf32, #tpu.memory_space<vmem>>, vector<16x8xf32>
    %4 = arith.maximumf %2, %3 : vector<16x8xf32>
    %c48 = arith.constant 48 : index
    %c0_3 = arith.constant 0 : index
    %5 = vector.load %arg1[%c48, %c0_3] : memref<256x8xf32, #tpu.memory_space<vmem>>, vector<16x8xf32>
    %6 = arith.maximumf %4, %5 : vector<16x8xf32>
    %c64 = arith.constant 64 : index
    %c0_4 = arith.constant 0 : index
    %7 = vector.load %arg1[%c64, %c0_4] : memref<256x8xf32, #tpu.memory_space<vmem>>, vector<16x8xf32>
    %8 = arith.maximumf %6, %7 : vector<16x8xf32>
    %c80 = arith.constant 80 : index
    %c0_5 = arith.constant 0 : index
    %9 = vector.load %arg1[%c80, %c0_5] : memref<256x8xf32, #tpu.memory_space<vmem>>, vector<16x8xf32>
    %10 = arith.maximumf %8, %9 : vector<16x8xf32>
    %c96 = arith.constant 96 : index
    %c0_6 = arith.constant 0 : index
    %11 = vector.load %arg1[%c96, %c0_6] : memref<256x8xf32, #tpu.memory_space<vmem>>, vector<16x8xf32>
    %12 = arith.maximumf %10, %11 : vector<16x8xf32>
    %c112 = arith.constant 112 : index
    %c0_7 = arith.constant 0 : index
    %13 = vector.load %arg1[%c112, %c0_7] : memref<256x8xf32, #tpu.memory_space<vmem>>, vector<16x8xf32>
    %14 = arith.maximumf %12, %13 : vector<16x8xf32>
    %c128 = arith.constant 128 : index
    %c0_8 = arith.constant 0 : index
    %15 = vector.load %arg1[%c128, %c0_8] : memref<256x8xf32, #tpu.memory_space<vmem>>, vector<16x8xf32>
    %16 = arith.maximumf %14, %15 : vector<16x8xf32>
    %c144 = arith.constant 144 : index
    %c0_9 = arith.constant 0 : index
    %17 = vector.load %arg1[%c144, %c0_9] : memref<256x8xf32, #tpu.memory_space<vmem>>, vector<16x8xf32>
    %18 = arith.maximumf %16, %17 : vector<16x8xf32>
    %c160 = arith.constant 160 : index
    %c0_10 = arith.constant 0 : index
    %19 = vector.load %arg1[%c160, %c0_10] : memref<256x8xf32, #tpu.memory_space<vmem>>, vector<16x8xf32>
    %20 = arith.maximumf %18, %19 : vector<16x8xf32>
    %c176 = arith.constant 176 : index
    %c0_11 = arith.constant 0 : index
    %21 = vector.load %arg1[%c176, %c0_11] : memref<256x8xf32, #tpu.memory_space<vmem>>, vector<16x8xf32>
    %22 = arith.maximumf %20, %21 : vector<16x8xf32>
    %c192 = arith.constant 192 : index
    %c0_12 = arith.constant 0 : index
    %23 = vector.load %arg1[%c192, %c0_12] : memref<256x8xf32, #tpu.memory_space<vmem>>, vector<16x8xf32>
    %24 = arith.maximumf %22, %23 : vector<16x8xf32>
    %c208 = arith.constant 208 : index
    %c0_13 = arith.constant 0 : index
    %25 = vector.load %arg1[%c208, %c0_13] : memref<256x8xf32, #tpu.memory_space<vmem>>, vector<16x8xf32>
    %26 = arith.maximumf %24, %25 : vector<16x8xf32>
    %c224 = arith.constant 224 : index
    %c0_14 = arith.constant 0 : index
    %27 = vector.load %arg1[%c224, %c0_14] : memref<256x8xf32, #tpu.memory_space<vmem>>, vector<16x8xf32>
    %28 = arith.maximumf %26, %27 : vector<16x8xf32>
    %c240 = arith.constant 240 : index
    %c0_15 = arith.constant 0 : index
    %29 = vector.load %arg1[%c240, %c0_15] : memref<256x8xf32, #tpu.memory_space<vmem>>, vector<16x8xf32>
    %30 = arith.maximumf %28, %29 : vector<16x8xf32>
    %cst = arith.constant dense<0xFF800000> : vector<8xf32>
    %31 = vector.multi_reduction <maximumf>, %30, %cst [0] : vector<16x8xf32> to vector<8xf32>
    %c0_16 = arith.constant 0 : index
    %c0_17 = arith.constant 0 : index
    %32 = vector.load %arg2[%c0_16, %c0_17] : memref<1x8xf32, #tpu.memory_space<vmem>>, vector<1x8xf32>
    %33 = vector.shape_cast %32 : vector<1x8xf32> to vector<8xf32>
    %34 = vector.shape_cast %31 : vector<8xf32> to vector<1x8xf32>
    tpu.vector_store %arg2[%c0_16, %c0_17], %34 {strides = array<i32>} : memref<1x8xf32, #tpu.memory_space<vmem>>, vector<1x8xf32>,
    %c0_18 = arith.constant 0 : index
    %c0_19 = arith.constant 0 : index
    %35 = vector.load %arg1[%c0_18, %c0_19] : memref<256x8xf32, #tpu.memory_space<vmem>>, vector<8x8xf32>
    %c16_20 = arith.constant 16 : index
    %c0_21 = arith.constant 0 : index
    %36 = vector.load %arg1[%c16_20, %c0_21] : memref<256x8xf32, #tpu.memory_space<vmem>>, vector<8x8xf32>
    %37 = arith.maximumf %35, %36 : vector<8x8xf32>
    %c32_22 = arith.constant 32 : index
    %c0_23 = arith.constant 0 : index
    %38 = vector.load %arg1[%c32_22, %c0_23] : memref<256x8xf32, #tpu.memory_space<vmem>>, vector<8x8xf32>
    %39 = arith.maximumf %37, %38 : vector<8x8xf32>
    %c48_24 = arith.constant 48 : index
    %c0_25 = arith.constant 0 : index
    %40 = vector.load %arg1[%c48_24, %c0_25] : memref<256x8xf32, #tpu.memory_space<vmem>>, vector<8x8xf32>
    %41 = arith.maximumf %39, %40 : vector<8x8xf32>
    %c64_26 = arith.constant 64 : index
    %c0_27 = arith.constant 0 : index
    %42 = vector.load %arg1[%c64_26, %c0_27] : memref<256x8xf32, #tpu.memory_space<vmem>>, vector<8x8xf32>
    %43 = arith.maximumf %41, %42 : vector<8x8xf32>
    %c80_28 = arith.constant 80 : index
    %c0_29 = arith.constant 0 : index
    %44 = vector.load %arg1[%c80_28, %c0_29] : memref<256x8xf32, #tpu.memory_space<vmem>>, vector<8x8xf32>
    %45 = arith.maximumf %43, %44 : vector<8x8xf32>
    %c96_30 = arith.constant 96 : index
    %c0_31 = arith.constant 0 : index
    %46 = vector.load %arg1[%c96_30, %c0_31] : memref<256x8xf32, #tpu.memory_space<vmem>>, vector<8x8xf32>
    %47 = arith.maximumf %45, %46 : vector<8x8xf32>
    %c112_32 = arith.constant 112 : index
    %c0_33 = arith.constant 0 : index
    %48 = vector.load %arg1[%c112_32, %c0_33] : memref<256x8xf32, #tpu.memory_space<vmem>>, vector<8x8xf32>
    %49 = arith.maximumf %47, %48 : vector<8x8xf32>
    %cst_34 = arith.constant dense<0xFF800000> : vector<8xf32>
    %50 = vector.multi_reduction <maximumf>, %49, %cst_34 [0] : vector<8x8xf32> to vector<8xf32>
    %c0_35 = arith.constant 0 : index
    %c0_36 = arith.constant 0 : index
    %51 = vector.load %arg3[%c0_35, %c0_36] : memref<4x8xf32, #tpu.memory_space<vmem>>, vector<1x8xf32>
    %52 = vector.shape_cast %51 : vector<1x8xf32> to vector<8xf32>
    %53 = vector.shape_cast %50 : vector<8xf32> to vector<1x8xf32>
    tpu.vector_store %arg3[%c0_35, %c0_36], %53 {strides = array<i32>} : memref<4x8xf32, #tpu.memory_space<vmem>>, vector<1x8xf32>,
    %c8 = arith.constant 8 : index
    %c0_37 = arith.constant 0 : index
    %54 = vector.load %arg1[%c8, %c0_37] : memref<256x8xf32, #tpu.memory_space<vmem>>, vector<8x8xf32>
    %c24 = arith.constant 24 : index
    %c0_38 = arith.constant 0 : index
    %55 = vector.load %arg1[%c24, %c0_38] : memref<256x8xf32, #tpu.memory_space<vmem>>, vector<8x8xf32>
    %56 = arith.maximumf %54, %55 : vector<8x8xf32>
    %c40 = arith.constant 40 : index
    %c0_39 = arith.constant 0 : index
    %57 = vector.load %arg1[%c40, %c0_39] : memref<256x8xf32, #tpu.memory_space<vmem>>, vector<8x8xf32>
    %58 = arith.maximumf %56, %57 : vector<8x8xf32>
    %c56 = arith.constant 56 : index
    %c0_40 = arith.constant 0 : index
    %59 = vector.load %arg1[%c56, %c0_40] : memref<256x8xf32, #tpu.memory_space<vmem>>, vector<8x8xf32>
    %60 = arith.maximumf %58, %59 : vector<8x8xf32>
    %c72 = arith.constant 72 : index
    %c0_41 = arith.constant 0 : index
    %61 = vector.load %arg1[%c72, %c0_41] : memref<256x8xf32, #tpu.memory_space<vmem>>, vector<8x8xf32>
    %62 = arith.maximumf %60, %61 : vector<8x8xf32>
    %c88 = arith.constant 88 : index
    %c0_42 = arith.constant 0 : index
    %63 = vector.load %arg1[%c88, %c0_42] : memref<256x8xf32, #tpu.memory_space<vmem>>, vector<8x8xf32>
    %64 = arith.maximumf %62, %63 : vector<8x8xf32>
    %c104 = arith.constant 104 : index
    %c0_43 = arith.constant 0 : index
    %65 = vector.load %arg1[%c104, %c0_43] : memref<256x8xf32, #tpu.memory_space<vmem>>, vector<8x8xf32>
    %66 = arith.maximumf %64, %65 : vector<8x8xf32>
    %c120 = arith.constant 120 : index
    %c0_44 = arith.constant 0 : index
    %67 = vector.load %arg1[%c120, %c0_44] : memref<256x8xf32, #tpu.memory_space<vmem>>, vector<8x8xf32>
    %68 = arith.maximumf %66, %67 : vector<8x8xf32>
    %cst_45 = arith.constant dense<0xFF800000> : vector<8xf32>
    %69 = vector.multi_reduction <maximumf>, %68, %cst_45 [0] : vector<8x8xf32> to vector<8xf32>
    %c1 = arith.constant 1 : index
    %c0_46 = arith.constant 0 : index
    %70 = vector.load %arg3[%c1, %c0_46] : memref<4x8xf32, #tpu.memory_space<vmem>>, vector<1x8xf32>
    %71 = vector.shape_cast %70 : vector<1x8xf32> to vector<8xf32>
    %72 = vector.shape_cast %69 : vector<8xf32> to vector<1x8xf32>
    tpu.vector_store %arg3[%c1, %c0_46], %72 {strides = array<i32>} : memref<4x8xf32, #tpu.memory_space<vmem>>, vector<1x8xf32>,
    %c128_47 = arith.constant 128 : index
    %c0_48 = arith.constant 0 : index
    %73 = vector.load %arg1[%c128_47, %c0_48] : memref<256x8xf32, #tpu.memory_space<vmem>>, vector<8x8xf32>
    %c144_49 = arith.constant 144 : index
    %c0_50 = arith.constant 0 : index
    %74 = vector.load %arg1[%c144_49, %c0_50] : memref<256x8xf32, #tpu.memory_space<vmem>>, vector<8x8xf32>
    %75 = arith.maximumf %73, %74 : vector<8x8xf32>
    %c160_51 = arith.constant 160 : index
    %c0_52 = arith.constant 0 : index
    %76 = vector.load %arg1[%c160_51, %c0_52] : memref<256x8xf32, #tpu.memory_space<vmem>>, vector<8x8xf32>
    %77 = arith.maximumf %75, %76 : vector<8x8xf32>
    %c176_53 = arith.constant 176 : index
    %c0_54 = arith.constant 0 : index
    %78 = vector.load %arg1[%c176_53, %c0_54] : memref<256x8xf32, #tpu.memory_space<vmem>>, vector<8x8xf32>
    %79 = arith.maximumf %77, %78 : vector<8x8xf32>
    %c192_55 = arith.constant 192 : index
    %c0_56 = arith.constant 0 : index
    %80 = vector.load %arg1[%c192_55, %c0_56] : memref<256x8xf32, #tpu.memory_space<vmem>>, vector<8x8xf32>
    %81 = arith.maximumf %79, %80 : vector<8x8xf32>
    %c208_57 = arith.constant 208 : index
    %c0_58 = arith.constant 0 : index
    %82 = vector.load %arg1[%c208_57, %c0_58] : memref<256x8xf32, #tpu.memory_space<vmem>>, vector<8x8xf32>
    %83 = arith.maximumf %81, %82 : vector<8x8xf32>
    %c224_59 = arith.constant 224 : index
    %c0_60 = arith.constant 0 : index
    %84 = vector.load %arg1[%c224_59, %c0_60] : memref<256x8xf32, #tpu.memory_space<vmem>>, vector<8x8xf32>
    %85 = arith.maximumf %83, %84 : vector<8x8xf32>
    %c240_61 = arith.constant 240 : index
    %c0_62 = arith.constant 0 : index
    %86 = vector.load %arg1[%c240_61, %c0_62] : memref<256x8xf32, #tpu.memory_space<vmem>>, vector<8x8xf32>
    %87 = arith.maximumf %85, %86 : vector<8x8xf32>
    %cst_63 = arith.constant dense<0xFF800000> : vector<8xf32>
    %88 = vector.multi_reduction <maximumf>, %87, %cst_63 [0] : vector<8x8xf32> to vector<8xf32>
    %c2 = arith.constant 2 : index
    %c0_64 = arith.constant 0 : index
    %89 = vector.load %arg3[%c2, %c0_64] : memref<4x8xf32, #tpu.memory_space<vmem>>, vector<1x8xf32>
    %90 = vector.shape_cast %89 : vector<1x8xf32> to vector<8xf32>
    %91 = vector.shape_cast %88 : vector<8xf32> to vector<1x8xf32>
    tpu.vector_store %arg3[%c2, %c0_64], %91 {strides = array<i32>} : memref<4x8xf32, #tpu.memory_space<vmem>>, vector<1x8xf32>,
    %c136 = arith.constant 136 : index
    %c0_65 = arith.constant 0 : index
    %92 = vector.load %arg1[%c136, %c0_65] : memref<256x8xf32, #tpu.memory_space<vmem>>, vector<8x8xf32>
    %c152 = arith.constant 152 : index
    %c0_66 = arith.constant 0 : index
    %93 = vector.load %arg1[%c152, %c0_66] : memref<256x8xf32, #tpu.memory_space<vmem>>, vector<8x8xf32>
    %94 = arith.maximumf %92, %93 : vector<8x8xf32>
    %c168 = arith.constant 168 : index
    %c0_67 = arith.constant 0 : index
    %95 = vector.load %arg1[%c168, %c0_67] : memref<256x8xf32, #tpu.memory_space<vmem>>, vector<8x8xf32>
    %96 = arith.maximumf %94, %95 : vector<8x8xf32>
    %c184 = arith.constant 184 : index
    %c0_68 = arith.constant 0 : index
    %97 = vector.load %arg1[%c184, %c0_68] : memref<256x8xf32, #tpu.memory_space<vmem>>, vector<8x8xf32>
    %98 = arith.maximumf %96, %97 : vector<8x8xf32>
    %c200 = arith.constant 200 : index
    %c0_69 = arith.constant 0 : index
    %99 = vector.load %arg1[%c200, %c0_69] : memref<256x8xf32, #tpu.memory_space<vmem>>, vector<8x8xf32>
    %100 = arith.maximumf %98, %99 : vector<8x8xf32>
    %c216 = arith.constant 216 : index
    %c0_70 = arith.constant 0 : index
    %101 = vector.load %arg1[%c216, %c0_70] : memref<256x8xf32, #tpu.memory_space<vmem>>, vector<8x8xf32>
    %102 = arith.maximumf %100, %101 : vector<8x8xf32>
    %c232 = arith.constant 232 : index
    %c0_71 = arith.constant 0 : index
    %103 = vector.load %arg1[%c232, %c0_71] : memref<256x8xf32, #tpu.memory_space<vmem>>, vector<8x8xf32>
    %104 = arith.maximumf %102, %103 : vector<8x8xf32>
    %c248 = arith.constant 248 : index
    %c0_72 = arith.constant 0 : index
    %105 = vector.load %arg1[%c248, %c0_72] : memref<256x8xf32, #tpu.memory_space<vmem>>, vector<8x8xf32>
    %106 = arith.maximumf %104, %105 : vector<8x8xf32>
    %cst_73 = arith.constant dense<0xFF800000> : vector<8xf32>
    %107 = vector.multi_reduction <maximumf>, %106, %cst_73 [0] : vector<8x8xf32> to vector<8xf32>
    %c3 = arith.constant 3 : index
    %c0_74 = arith.constant 0 : index
    %108 = vector.load %arg3[%c3, %c0_74] : memref<4x8xf32, #tpu.memory_space<vmem>>, vector<1x8xf32>
    %109 = vector.shape_cast %108 : vector<1x8xf32> to vector<8xf32>
    %110 = vector.shape_cast %107 : vector<8xf32> to vector<1x8xf32>
    tpu.vector_store %arg3[%c3, %c0_74], %110 {strides = array<i32>} : memref<4x8xf32, #tpu.memory_space<vmem>>, vector<1x8xf32>,
    %c0_75 = arith.constant 0 : index
    %c0_76 = arith.constant 0 : index
    %111 = vector.load %arg1[%c0_75, %c0_76] : memref<256x8xf32, #tpu.memory_space<vmem>>, vector<4x8xf32>
    %c16_77 = arith.constant 16 : index
    %c0_78 = arith.constant 0 : index
    %112 = vector.load %arg1[%c16_77, %c0_78] : memref<256x8xf32, #tpu.memory_space<vmem>>, vector<4x8xf32>
    %113 = arith.maximumf %111, %112 : vector<4x8xf32>
    %c32_79 = arith.constant 32 : index
    %c0_80 = arith.constant 0 : index
    %114 = vector.load %arg1[%c32_79, %c0_80] : memref<256x8xf32, #tpu.memory_space<vmem>>, vector<4x8xf32>
    %115 = arith.maximumf %113, %114 : vector<4x8xf32>
    %c48_81 = arith.constant 48 : index
    %c0_82 = arith.constant 0 : index
    %116 = vector.load %arg1[%c48_81, %c0_82] : memref<256x8xf32, #tpu.memory_space<vmem>>, vector<4x8xf32>
    %117 = arith.maximumf %115, %116 : vector<4x8xf32>
    %cst_83 = arith.constant dense<0xFF800000> : vector<8xf32>
    %118 = vector.multi_reduction <maximumf>, %117, %cst_83 [0] : vector<4x8xf32> to vector<8xf32>
    %c0_84 = arith.constant 0 : index
    %c0_85 = arith.constant 0 : index
    %119 = vector.load %arg4[%c0_84, %c0_85] : memref<16x8xf32, #tpu.memory_space<vmem>>, vector<1x8xf32>
    %120 = vector.shape_cast %119 : vector<1x8xf32> to vector<8xf32>
    %121 = vector.shape_cast %118 : vector<8xf32> to vector<1x8xf32>
    tpu.vector_store %arg4[%c0_84, %c0_85], %121 {strides = array<i32>} : memref<16x8xf32, #tpu.memory_space<vmem>>, vector<1x8xf32>,
    %c4 = arith.constant 4 : index
    %c0_86 = arith.constant 0 : index
    %122 = vector.load %arg1[%c4, %c0_86] : memref<256x8xf32, #tpu.memory_space<vmem>>, vector<4x8xf32>
    %c20 = arith.constant 20 : index
    %c0_87 = arith.constant 0 : index
    %123 = vector.load %arg1[%c20, %c0_87] : memref<256x8xf32, #tpu.memory_space<vmem>>, vector<4x8xf32>
    %124 = arith.maximumf %122, %123 : vector<4x8xf32>
    %c36 = arith.constant 36 : index
    %c0_88 = arith.constant 0 : index
    %125 = vector.load %arg1[%c36, %c0_88] : memref<256x8xf32, #tpu.memory_space<vmem>>, vector<4x8xf32>
    %126 = arith.maximumf %124, %125 : vector<4x8xf32>
    %c52 = arith.constant 52 : index
    %c0_89 = arith.constant 0 : index
    %127 = vector.load %arg1[%c52, %c0_89] : memref<256x8xf32, #tpu.memory_space<vmem>>, vector<4x8xf32>
    %128 = arith.maximumf %126, %127 : vector<4x8xf32>
    %cst_90 = arith.constant dense<0xFF800000> : vector<8xf32>
    %129 = vector.multi_reduction <maximumf>, %128, %cst_90 [0] : vector<4x8xf32> to vector<8xf32>
    %c1_91 = arith.constant 1 : index
    %c0_92 = arith.constant 0 : index
    %130 = vector.load %arg4[%c1_91, %c0_92] : memref<16x8xf32, #tpu.memory_space<vmem>>, vector<1x8xf32>
    %131 = vector.shape_cast %130 : vector<1x8xf32> to vector<8xf32>
    %132 = vector.shape_cast %129 : vector<8xf32> to vector<1x8xf32>
    tpu.vector_store %arg4[%c1_91, %c0_92], %132 {strides = array<i32>} : memref<16x8xf32, #tpu.memory_space<vmem>>, vector<1x8xf32>,
    %c8_93 = arith.constant 8 : index
    %c0_94 = arith.constant 0 : index
    %133 = vector.load %arg1[%c8_93, %c0_94] : memref<256x8xf32, #tpu.memory_space<vmem>>, vector<4x8xf32>
    %c24_95 = arith.constant 24 : index
    %c0_96 = arith.constant 0 : index
    %134 = vector.load %arg1[%c24_95, %c0_96] : memref<256x8xf32, #tpu.memory_space<vmem>>, vector<4x8xf32>
    %135 = arith.maximumf %133, %134 : vector<4x8xf32>
    %c40_97 = arith.constant 40 : index
    %c0_98 = arith.constant 0 : index
    %136 = vector.load %arg1[%c40_97, %c0_98] : memref<256x8xf32, #tpu.memory_space<vmem>>, vector<4x8xf32>
    %137 = arith.maximumf %135, %136 : vector<4x8xf32>
    %c56_99 = arith.constant 56 : index
    %c0_100 = arith.constant 0 : index
    %138 = vector.load %arg1[%c56_99, %c0_100] : memref<256x8xf32, #tpu.memory_space<vmem>>, vector<4x8xf32>
    %139 = arith.maximumf %137, %138 : vector<4x8xf32>
    %cst_101 = arith.constant dense<0xFF800000> : vector<8xf32>
    %140 = vector.multi_reduction <maximumf>, %139, %cst_101 [0] : vector<4x8xf32> to vector<8xf32>
    %c2_102 = arith.constant 2 : index
    %c0_103 = arith.constant 0 : index
    %141 = vector.load %arg4[%c2_102, %c0_103] : memref<16x8xf32, #tpu.memory_space<vmem>>, vector<1x8xf32>
    %142 = vector.shape_cast %141 : vector<1x8xf32> to vector<8xf32>
    %143 = vector.shape_cast %140 : vector<8xf32> to vector<1x8xf32>
    tpu.vector_store %arg4[%c2_102, %c0_103], %143 {strides = array<i32>} : memref<16x8xf32, #tpu.memory_space<vmem>>, vector<1x8xf32>,
    %c12 = arith.constant 12 : index
    %c0_104 = arith.constant 0 : index
    %144 = vector.load %arg1[%c12, %c0_104] : memref<256x8xf32, #tpu.memory_space<vmem>>, vector<4x8xf32>
    %c28 = arith.constant 28 : index
    %c0_105 = arith.constant 0 : index
    %145 = vector.load %arg1[%c28, %c0_105] : memref<256x8xf32, #tpu.memory_space<vmem>>, vector<4x8xf32>
    %146 = arith.maximumf %144, %145 : vector<4x8xf32>
    %c44 = arith.constant 44 : index
    %c0_106 = arith.constant 0 : index
    %147 = vector.load %arg1[%c44, %c0_106] : memref<256x8xf32, #tpu.memory_space<vmem>>, vector<4x8xf32>
    %148 = arith.maximumf %146, %147 : vector<4x8xf32>
    %c60 = arith.constant 60 : index
    %c0_107 = arith.constant 0 : index
    %149 = vector.load %arg1[%c60, %c0_107] : memref<256x8xf32, #tpu.memory_space<vmem>>, vector<4x8xf32>
    %150 = arith.maximumf %148, %149 : vector<4x8xf32>
    %cst_108 = arith.constant dense<0xFF800000> : vector<8xf32>
    %151 = vector.multi_reduction <maximumf>, %150, %cst_108 [0] : vector<4x8xf32> to vector<8xf32>
    %c3_109 = arith.constant 3 : index
    %c0_110 = arith.constant 0 : index
    %152 = vector.load %arg4[%c3_109, %c0_110] : memref<16x8xf32, #tpu.memory_space<vmem>>, vector<1x8xf32>
    %153 = vector.shape_cast %152 : vector<1x8xf32> to vector<8xf32>
    %154 = vector.shape_cast %151 : vector<8xf32> to vector<1x8xf32>
    tpu.vector_store %arg4[%c3_109, %c0_110], %154 {strides = array<i32>} : memref<16x8xf32, #tpu.memory_space<vmem>>, vector<1x8xf32>,
    %c64_111 = arith.constant 64 : index
    %c0_112 = arith.constant 0 : index
    %155 = vector.load %arg1[%c64_111, %c0_112] : memref<256x8xf32, #tpu.memory_space<vmem>>, vector<4x8xf32>
    %c80_113 = arith.constant 80 : index
    %c0_114 = arith.constant 0 : index
    %156 = vector.load %arg1[%c80_113, %c0_114] : memref<256x8xf32, #tpu.memory_space<vmem>>, vector<4x8xf32>
    %157 = arith.maximumf %155, %156 : vector<4x8xf32>
    %c96_115 = arith.constant 96 : index
    %c0_116 = arith.constant 0 : index
    %158 = vector.load %arg1[%c96_115, %c0_116] : memref<256x8xf32, #tpu.memory_space<vmem>>, vector<4x8xf32>
    %159 = arith.maximumf %157, %158 : vector<4x8xf32>
    %c112_117 = arith.constant 112 : index
    %c0_118 = arith.constant 0 : index
    %160 = vector.load %arg1[%c112_117, %c0_118] : memref<256x8xf32, #tpu.memory_space<vmem>>, vector<4x8xf32>
    %161 = arith.maximumf %159, %160 : vector<4x8xf32>
    %cst_119 = arith.constant dense<0xFF800000> : vector<8xf32>
    %162 = vector.multi_reduction <maximumf>, %161, %cst_119 [0] : vector<4x8xf32> to vector<8xf32>
    %c4_120 = arith.constant 4 : index
    %c0_121 = arith.constant 0 : index
    %163 = vector.load %arg4[%c4_120, %c0_121] : memref<16x8xf32, #tpu.memory_space<vmem>>, vector<1x8xf32>
    %164 = vector.shape_cast %163 : vector<1x8xf32> to vector<8xf32>
    %165 = vector.shape_cast %162 : vector<8xf32> to vector<1x8xf32>
    tpu.vector_store %arg4[%c4_120, %c0_121], %165 {strides = array<i32>} : memref<16x8xf32, #tpu.memory_space<vmem>>, vector<1x8xf32>,
    %c68 = arith.constant 68 : index
    %c0_122 = arith.constant 0 : index
    %166 = vector.load %arg1[%c68, %c0_122] : memref<256x8xf32, #tpu.memory_space<vmem>>, vector<4x8xf32>
    %c84 = arith.constant 84 : index
    %c0_123 = arith.constant 0 : index
    %167 = vector.load %arg1[%c84, %c0_123] : memref<256x8xf32, #tpu.memory_space<vmem>>, vector<4x8xf32>
    %168 = arith.maximumf %166, %167 : vector<4x8xf32>
    %c100 = arith.constant 100 : index
    %c0_124 = arith.constant 0 : index
    %169 = vector.load %arg1[%c100, %c0_124] : memref<256x8xf32, #tpu.memory_space<vmem>>, vector<4x8xf32>
    %170 = arith.maximumf %168, %169 : vector<4x8xf32>
    %c116 = arith.constant 116 : index
    %c0_125 = arith.constant 0 : index
    %171 = vector.load %arg1[%c116, %c0_125] : memref<256x8xf32, #tpu.memory_space<vmem>>, vector<4x8xf32>
    %172 = arith.maximumf %170, %171 : vector<4x8xf32>
    %cst_126 = arith.constant dense<0xFF800000> : vector<8xf32>
    %173 = vector.multi_reduction <maximumf>, %172, %cst_126 [0] : vector<4x8xf32> to vector<8xf32>
    %c5 = arith.constant 5 : index
    %c0_127 = arith.constant 0 : index
    %174 = vector.load %arg4[%c5, %c0_127] : memref<16x8xf32, #tpu.memory_space<vmem>>, vector<1x8xf32>
    %175 = vector.shape_cast %174 : vector<1x8xf32> to vector<8xf32>
    %176 = vector.shape_cast %173 : vector<8xf32> to vector<1x8xf32>
    tpu.vector_store %arg4[%c5, %c0_127], %176 {strides = array<i32>} : memref<16x8xf32, #tpu.memory_space<vmem>>, vector<1x8xf32>,
    %c72_128 = arith.constant 72 : index
    %c0_129 = arith.constant 0 : index
    %177 = vector.load %arg1[%c72_128, %c0_129] : memref<256x8xf32, #tpu.memory_space<vmem>>, vector<4x8xf32>
    %c88_130 = arith.constant 88 : index
    %c0_131 = arith.constant 0 : index
    %178 = vector.load %arg1[%c88_130, %c0_131] : memref<256x8xf32, #tpu.memory_space<vmem>>, vector<4x8xf32>
    %179 = arith.maximumf %177, %178 : vector<4x8xf32>
    %c104_132 = arith.constant 104 : index
    %c0_133 = arith.constant 0 : index
    %180 = vector.load %arg1[%c104_132, %c0_133] : memref<256x8xf32, #tpu.memory_space<vmem>>, vector<4x8xf32>
    %181 = arith.maximumf %179, %180 : vector<4x8xf32>
    %c120_134 = arith.constant 120 : index
    %c0_135 = arith.constant 0 : index
    %182 = vector.load %arg1[%c120_134, %c0_135] : memref<256x8xf32, #tpu.memory_space<vmem>>, vector<4x8xf32>
    %183 = arith.maximumf %181, %182 : vector<4x8xf32>
    %cst_136 = arith.constant dense<0xFF800000> : vector<8xf32>
    %184 = vector.multi_reduction <maximumf>, %183, %cst_136 [0] : vector<4x8xf32> to vector<8xf32>
    %c6 = arith.constant 6 : index
    %c0_137 = arith.constant 0 : index
    %185 = vector.load %arg4[%c6, %c0_137] : memref<16x8xf32, #tpu.memory_space<vmem>>, vector<1x8xf32>
    %186 = vector.shape_cast %185 : vector<1x8xf32> to vector<8xf32>
    %187 = vector.shape_cast %184 : vector<8xf32> to vector<1x8xf32>
    tpu.vector_store %arg4[%c6, %c0_137], %187 {strides = array<i32>} : memref<16x8xf32, #tpu.memory_space<vmem>>, vector<1x8xf32>,
    %c76 = arith.constant 76 : index
    %c0_138 = arith.constant 0 : index
    %188 = vector.load %arg1[%c76, %c0_138] : memref<256x8xf32, #tpu.memory_space<vmem>>, vector<4x8xf32>
    %c92 = arith.constant 92 : index
    %c0_139 = arith.constant 0 : index
    %189 = vector.load %arg1[%c92, %c0_139] : memref<256x8xf32, #tpu.memory_space<vmem>>, vector<4x8xf32>
    %190 = arith.maximumf %188, %189 : vector<4x8xf32>
    %c108 = arith.constant 108 : index
    %c0_140 = arith.constant 0 : index
    %191 = vector.load %arg1[%c108, %c0_140] : memref<256x8xf32, #tpu.memory_space<vmem>>, vector<4x8xf32>
    %192 = arith.maximumf %190, %191 : vector<4x8xf32>
    %c124 = arith.constant 124 : index
    %c0_141 = arith.constant 0 : index
    %193 = vector.load %arg1[%c124, %c0_141] : memref<256x8xf32, #tpu.memory_space<vmem>>, vector<4x8xf32>
    %194 = arith.maximumf %192, %193 : vector<4x8xf32>
    %cst_142 = arith.constant dense<0xFF800000> : vector<8xf32>
    %195 = vector.multi_reduction <maximumf>, %194, %cst_142 [0] : vector<4x8xf32> to vector<8xf32>
    %c7 = arith.constant 7 : index
    %c0_143 = arith.constant 0 : index
    %196 = vector.load %arg4[%c7, %c0_143] : memref<16x8xf32, #tpu.memory_space<vmem>>, vector<1x8xf32>
    %197 = vector.shape_cast %196 : vector<1x8xf32> to vector<8xf32>
    %198 = vector.shape_cast %195 : vector<8xf32> to vector<1x8xf32>
    tpu.vector_store %arg4[%c7, %c0_143], %198 {strides = array<i32>} : memref<16x8xf32, #tpu.memory_space<vmem>>, vector<1x8xf32>,
    %c128_144 = arith.constant 128 : index
    %c0_145 = arith.constant 0 : index
    %199 = vector.load %arg1[%c128_144, %c0_145] : memref<256x8xf32, #tpu.memory_space<vmem>>, vector<4x8xf32>
    %c144_146 = arith.constant 144 : index
    %c0_147 = arith.constant 0 : index
    %200 = vector.load %arg1[%c144_146, %c0_147] : memref<256x8xf32, #tpu.memory_space<vmem>>, vector<4x8xf32>
    %201 = arith.maximumf %199, %200 : vector<4x8xf32>
    %c160_148 = arith.constant 160 : index
    %c0_149 = arith.constant 0 : index
    %202 = vector.load %arg1[%c160_148, %c0_149] : memref<256x8xf32, #tpu.memory_space<vmem>>, vector<4x8xf32>
    %203 = arith.maximumf %201, %202 : vector<4x8xf32>
    %c176_150 = arith.constant 176 : index
    %c0_151 = arith.constant 0 : index
    %204 = vector.load %arg1[%c176_150, %c0_151] : memref<256x8xf32, #tpu.memory_space<vmem>>, vector<4x8xf32>
    %205 = arith.maximumf %203, %204 : vector<4x8xf32>
    %cst_152 = arith.constant dense<0xFF800000> : vector<8xf32>
    %206 = vector.multi_reduction <maximumf>, %205, %cst_152 [0] : vector<4x8xf32> to vector<8xf32>
    %c8_153 = arith.constant 8 : index
    %c0_154 = arith.constant 0 : index
    %207 = vector.load %arg4[%c8_153, %c0_154] : memref<16x8xf32, #tpu.memory_space<vmem>>, vector<1x8xf32>
    %208 = vector.shape_cast %207 : vector<1x8xf32> to vector<8xf32>
    %209 = vector.shape_cast %206 : vector<8xf32> to vector<1x8xf32>
    tpu.vector_store %arg4[%c8_153, %c0_154], %209 {strides = array<i32>} : memref<16x8xf32, #tpu.memory_space<vmem>>, vector<1x8xf32>,
    %c132 = arith.constant 132 : index
    %c0_155 = arith.constant 0 : index
    %210 = vector.load %arg1[%c132, %c0_155] : memref<256x8xf32, #tpu.memory_space<vmem>>, vector<4x8xf32>
    %c148 = arith.constant 148 : index
    %c0_156 = arith.constant 0 : index
    %211 = vector.load %arg1[%c148, %c0_156] : memref<256x8xf32, #tpu.memory_space<vmem>>, vector<4x8xf32>
    %212 = arith.maximumf %210, %211 : vector<4x8xf32>
    %c164 = arith.constant 164 : index
    %c0_157 = arith.constant 0 : index
    %213 = vector.load %arg1[%c164, %c0_157] : memref<256x8xf32, #tpu.memory_space<vmem>>, vector<4x8xf32>
    %214 = arith.maximumf %212, %213 : vector<4x8xf32>
    %c180 = arith.constant 180 : index
    %c0_158 = arith.constant 0 : index
    %215 = vector.load %arg1[%c180, %c0_158] : memref<256x8xf32, #tpu.memory_space<vmem>>, vector<4x8xf32>
    %216 = arith.maximumf %214, %215 : vector<4x8xf32>
    %cst_159 = arith.constant dense<0xFF800000> : vector<8xf32>
    %217 = vector.multi_reduction <maximumf>, %216, %cst_159 [0] : vector<4x8xf32> to vector<8xf32>
    %c9 = arith.constant 9 : index
    %c0_160 = arith.constant 0 : index
    %218 = vector.load %arg4[%c9, %c0_160] : memref<16x8xf32, #tpu.memory_space<vmem>>, vector<1x8xf32>
    %219 = vector.shape_cast %218 : vector<1x8xf32> to vector<8xf32>
    %220 = vector.shape_cast %217 : vector<8xf32> to vector<1x8xf32>
    tpu.vector_store %arg4[%c9, %c0_160], %220 {strides = array<i32>} : memref<16x8xf32, #tpu.memory_space<vmem>>, vector<1x8xf32>,
    %c136_161 = arith.constant 136 : index
    %c0_162 = arith.constant 0 : index
    %221 = vector.load %arg1[%c136_161, %c0_162] : memref<256x8xf32, #tpu.memory_space<vmem>>, vector<4x8xf32>
    %c152_163 = arith.constant 152 : index
    %c0_164 = arith.constant 0 : index
    %222 = vector.load %arg1[%c152_163, %c0_164] : memref<256x8xf32, #tpu.memory_space<vmem>>, vector<4x8xf32>
    %223 = arith.maximumf %221, %222 : vector<4x8xf32>
    %c168_165 = arith.constant 168 : index
    %c0_166 = arith.constant 0 : index
    %224 = vector.load %arg1[%c168_165, %c0_166] : memref<256x8xf32, #tpu.memory_space<vmem>>, vector<4x8xf32>
    %225 = arith.maximumf %223, %224 : vector<4x8xf32>
    %c184_167 = arith.constant 184 : index
    %c0_168 = arith.constant 0 : index
    %226 = vector.load %arg1[%c184_167, %c0_168] : memref<256x8xf32, #tpu.memory_space<vmem>>, vector<4x8xf32>
    %227 = arith.maximumf %225, %226 : vector<4x8xf32>
    %cst_169 = arith.constant dense<0xFF800000> : vector<8xf32>
    %228 = vector.multi_reduction <maximumf>, %227, %cst_169 [0] : vector<4x8xf32> to vector<8xf32>
    %c10 = arith.constant 10 : index
    %c0_170 = arith.constant 0 : index
    %229 = vector.load %arg4[%c10, %c0_170] : memref<16x8xf32, #tpu.memory_space<vmem>>, vector<1x8xf32>
    %230 = vector.shape_cast %229 : vector<1x8xf32> to vector<8xf32>
    %231 = vector.shape_cast %228 : vector<8xf32> to vector<1x8xf32>
    tpu.vector_store %arg4[%c10, %c0_170], %231 {strides = array<i32>} : memref<16x8xf32, #tpu.memory_space<vmem>>, vector<1x8xf32>,
    %c140 = arith.constant 140 : index
    %c0_171 = arith.constant 0 : index
    %232 = vector.load %arg1[%c140, %c0_171] : memref<256x8xf32, #tpu.memory_space<vmem>>, vector<4x8xf32>
    %c156 = arith.constant 156 : index
    %c0_172 = arith.constant 0 : index
    %233 = vector.load %arg1[%c156, %c0_172] : memref<256x8xf32, #tpu.memory_space<vmem>>, vector<4x8xf32>
    %234 = arith.maximumf %232, %233 : vector<4x8xf32>
    %c172 = arith.constant 172 : index
    %c0_173 = arith.constant 0 : index
    %235 = vector.load %arg1[%c172, %c0_173] : memref<256x8xf32, #tpu.memory_space<vmem>>, vector<4x8xf32>
    %236 = arith.maximumf %234, %235 : vector<4x8xf32>
    %c188 = arith.constant 188 : index
    %c0_174 = arith.constant 0 : index
    %237 = vector.load %arg1[%c188, %c0_174] : memref<256x8xf32, #tpu.memory_space<vmem>>, vector<4x8xf32>
    %238 = arith.maximumf %236, %237 : vector<4x8xf32>
    %cst_175 = arith.constant dense<0xFF800000> : vector<8xf32>
    %239 = vector.multi_reduction <maximumf>, %238, %cst_175 [0] : vector<4x8xf32> to vector<8xf32>
    %c11 = arith.constant 11 : index
    %c0_176 = arith.constant 0 : index
    %240 = vector.load %arg4[%c11, %c0_176] : memref<16x8xf32, #tpu.memory_space<vmem>>, vector<1x8xf32>
    %241 = vector.shape_cast %240 : vector<1x8xf32> to vector<8xf32>
    %242 = vector.shape_cast %239 : vector<8xf32> to vector<1x8xf32>
    tpu.vector_store %arg4[%c11, %c0_176], %242 {strides = array<i32>} : memref<16x8xf32, #tpu.memory_space<vmem>>, vector<1x8xf32>,
    %c192_177 = arith.constant 192 : index
    %c0_178 = arith.constant 0 : index
    %243 = vector.load %arg1[%c192_177, %c0_178] : memref<256x8xf32, #tpu.memory_space<vmem>>, vector<4x8xf32>
    %c208_179 = arith.constant 208 : index
    %c0_180 = arith.constant 0 : index
    %244 = vector.load %arg1[%c208_179, %c0_180] : memref<256x8xf32, #tpu.memory_space<vmem>>, vector<4x8xf32>
    %245 = arith.maximumf %243, %244 : vector<4x8xf32>
    %c224_181 = arith.constant 224 : index
    %c0_182 = arith.constant 0 : index
    %246 = vector.load %arg1[%c224_181, %c0_182] : memref<256x8xf32, #tpu.memory_space<vmem>>, vector<4x8xf32>
    %247 = arith.maximumf %245, %246 : vector<4x8xf32>
    %c240_183 = arith.constant 240 : index
    %c0_184 = arith.constant 0 : index
    %248 = vector.load %arg1[%c240_183, %c0_184] : memref<256x8xf32, #tpu.memory_space<vmem>>, vector<4x8xf32>
    %249 = arith.maximumf %247, %248 : vector<4x8xf32>
    %cst_185 = arith.constant dense<0xFF800000> : vector<8xf32>
    %250 = vector.multi_reduction <maximumf>, %249, %cst_185 [0] : vector<4x8xf32> to vector<8xf32>
    %c12_186 = arith.constant 12 : index
    %c0_187 = arith.constant 0 : index
    %251 = vector.load %arg4[%c12_186, %c0_187] : memref<16x8xf32, #tpu.memory_space<vmem>>, vector<1x8xf32>
    %252 = vector.shape_cast %251 : vector<1x8xf32> to vector<8xf32>
    %253 = vector.shape_cast %250 : vector<8xf32> to vector<1x8xf32>
    tpu.vector_store %arg4[%c12_186, %c0_187], %253 {strides = array<i32>} : memref<16x8xf32, #tpu.memory_space<vmem>>, vector<1x8xf32>,
    %c196 = arith.constant 196 : index
    %c0_188 = arith.constant 0 : index
    %254 = vector.load %arg1[%c196, %c0_188] : memref<256x8xf32, #tpu.memory_space<vmem>>, vector<4x8xf32>
    %c212 = arith.constant 212 : index
    %c0_189 = arith.constant 0 : index
    %255 = vector.load %arg1[%c212, %c0_189] : memref<256x8xf32, #tpu.memory_space<vmem>>, vector<4x8xf32>
    %256 = arith.maximumf %254, %255 : vector<4x8xf32>
    %c228 = arith.constant 228 : index
    %c0_190 = arith.constant 0 : index
    %257 = vector.load %arg1[%c228, %c0_190] : memref<256x8xf32, #tpu.memory_space<vmem>>, vector<4x8xf32>
    %258 = arith.maximumf %256, %257 : vector<4x8xf32>
    %c244 = arith.constant 244 : index
    %c0_191 = arith.constant 0 : index
    %259 = vector.load %arg1[%c244, %c0_191] : memref<256x8xf32, #tpu.memory_space<vmem>>, vector<4x8xf32>
    %260 = arith.maximumf %258, %259 : vector<4x8xf32>
    %cst_192 = arith.constant dense<0xFF800000> : vector<8xf32>
    %261 = vector.multi_reduction <maximumf>, %260, %cst_192 [0] : vector<4x8xf32> to vector<8xf32>
    %c13 = arith.constant 13 : index
    %c0_193 = arith.constant 0 : index
    %262 = vector.load %arg4[%c13, %c0_193] : memref<16x8xf32, #tpu.memory_space<vmem>>, vector<1x8xf32>
    %263 = vector.shape_cast %262 : vector<1x8xf32> to vector<8xf32>
    %264 = vector.shape_cast %261 : vector<8xf32> to vector<1x8xf32>
    tpu.vector_store %arg4[%c13, %c0_193], %264 {strides = array<i32>} : memref<16x8xf32, #tpu.memory_space<vmem>>, vector<1x8xf32>,
    %c200_194 = arith.constant 200 : index
    %c0_195 = arith.constant 0 : index
    %265 = vector.load %arg1[%c200_194, %c0_195] : memref<256x8xf32, #tpu.memory_space<vmem>>, vector<4x8xf32>
    %c216_196 = arith.constant 216 : index
    %c0_197 = arith.constant 0 : index
    %266 = vector.load %arg1[%c216_196, %c0_197] : memref<256x8xf32, #tpu.memory_space<vmem>>, vector<4x8xf32>
    %267 = arith.maximumf %265, %266 : vector<4x8xf32>
    %c232_198 = arith.constant 232 : index
    %c0_199 = arith.constant 0 : index
    %268 = vector.load %arg1[%c232_198, %c0_199] : memref<256x8xf32, #tpu.memory_space<vmem>>, vector<4x8xf32>
    %269 = arith.maximumf %267, %268 : vector<4x8xf32>
    %c248_200 = arith.constant 248 : index
    %c0_201 = arith.constant 0 : index
    %270 = vector.load %arg1[%c248_200, %c0_201] : memref<256x8xf32, #tpu.memory_space<vmem>>, vector<4x8xf32>
    %271 = arith.maximumf %269, %270 : vector<4x8xf32>
    %cst_202 = arith.constant dense<0xFF800000> : vector<8xf32>
    %272 = vector.multi_reduction <maximumf>, %271, %cst_202 [0] : vector<4x8xf32> to vector<8xf32>
    %c14 = arith.constant 14 : index
    %c0_203 = arith.constant 0 : index
    %273 = vector.load %arg4[%c14, %c0_203] : memref<16x8xf32, #tpu.memory_space<vmem>>, vector<1x8xf32>
    %274 = vector.shape_cast %273 : vector<1x8xf32> to vector<8xf32>
    %275 = vector.shape_cast %272 : vector<8xf32> to vector<1x8xf32>
    tpu.vector_store %arg4[%c14, %c0_203], %275 {strides = array<i32>} : memref<16x8xf32, #tpu.memory_space<vmem>>, vector<1x8xf32>,
    %c204 = arith.constant 204 : index
    %c0_204 = arith.constant 0 : index
    %276 = vector.load %arg1[%c204, %c0_204] : memref<256x8xf32, #tpu.memory_space<vmem>>, vector<4x8xf32>
    %c220 = arith.constant 220 : index
    %c0_205 = arith.constant 0 : index
    %277 = vector.load %arg1[%c220, %c0_205] : memref<256x8xf32, #tpu.memory_space<vmem>>, vector<4x8xf32>
    %278 = arith.maximumf %276, %277 : vector<4x8xf32>
    %c236 = arith.constant 236 : index
    %c0_206 = arith.constant 0 : index
    %279 = vector.load %arg1[%c236, %c0_206] : memref<256x8xf32, #tpu.memory_space<vmem>>, vector<4x8xf32>
    %280 = arith.maximumf %278, %279 : vector<4x8xf32>
    %c252 = arith.constant 252 : index
    %c0_207 = arith.constant 0 : index
    %281 = vector.load %arg1[%c252, %c0_207] : memref<256x8xf32, #tpu.memory_space<vmem>>, vector<4x8xf32>
    %282 = arith.maximumf %280, %281 : vector<4x8xf32>
    %cst_208 = arith.constant dense<0xFF800000> : vector<8xf32>
    %283 = vector.multi_reduction <maximumf>, %282, %cst_208 [0] : vector<4x8xf32> to vector<8xf32>
    %c15 = arith.constant 15 : index
    %c0_209 = arith.constant 0 : index
    %284 = vector.load %arg4[%c15, %c0_209] : memref<16x8xf32, #tpu.memory_space<vmem>>, vector<1x8xf32>
    %285 = vector.shape_cast %284 : vector<1x8xf32> to vector<8xf32>
    %286 = vector.shape_cast %283 : vector<8xf32> to vector<1x8xf32>
    tpu.vector_store %arg4[%c15, %c0_209], %286 {strides = array<i32>} : memref<16x8xf32, #tpu.memory_space<vmem>>, vector<1x8xf32>,
    return
  }
  func.func @transform_0(%arg0: i32) -> (i32, i32) {
    %c0_i32 = arith.constant 0 : i32
    %c0_i32_0 = arith.constant 0 : i32
    return %c0_i32, %arg0 : i32, i32
  }
  func.func @transform_1(%arg0: i32) -> (i32, i32) {
    %c0_i32 = arith.constant 0 : i32
    %c0_i32_0 = arith.constant 0 : i32
    return %c0_i32, %arg0 : i32, i32
  }
  func.func @transform_2(%arg0: i32) -> (i32, i32) {
    %c0_i32 = arith.constant 0 : i32
    %c0_i32_0 = arith.constant 0 : i32
    return %c0_i32, %arg0 : i32, i32
  }
  func.func @transform_3(%arg0: i32) -> (i32, i32) {
    %c0_i32 = arith.constant 0 : i32
    %c0_i32_0 = arith.constant 0 : i32
    return %c0_i32, %arg0 : i32, i32
  }
}

</mosaic_0001>

<llo_original>
// kernel: tpu_custom_call.1
$region0: #{tpu_custom_call.1}
  #allocation0 [shape = 'u32[]', space=smem, size = 0x4, offset = 0x4, fixed_abs, tag = 'smem constant byte address 0x4 - core index']
  #allocation1 [shape = 'u32[144,128]{1,0:T(1,128)}', space=vmem, size = 0x12000, scoped, tag = 'internal scratch']
  #allocation2 [shape = 'f32[256,8]{1,0:T(8,128)}', space=vmem, size = 0x20000, scoped, tag = 'scratch operand']
  %s0 = inlined_call_operand.hbm [shape: f32[8,256], index: 0, kind: input, shape index: {}]
  %s1 = inlined_call_operand.hbm [shape: f32[1,8], index: 1, kind: output, shape index: {0}]
  %s2 = inlined_call_operand.hbm [shape: f32[4,8], index: 2, kind: output, shape index: {1}]
  %s3 = inlined_call_operand.vmem [shape: f32[16,8], index: 3, kind: output, shape index: {2}]
  %4 = xla_tuple %s1, %s2, %s3
  %s5 = sld [smem:[#allocation0]]
  $region34: #{tpu_custom_call.1} parent=0
    _
  %s7 = ssub.s32 1, %s5
  %s8 = scalar_select 0, %s7, %s5
  $region1: #{tpu_custom_call.1} parent=0
    #allocation3 [shape = 'u8[8192]{0}', space=vmem, size = 0x2000, scoped, tag = 'input window, operand 0, single buffered']
    #allocation4 [shape = 's32[1]{0}', space=sflag, size = 0x4, scoped, tag = 'scoped memory for tpu_custom_call.1']
    #allocation5 [shape = 's32[1]{0}', space=sflag, size = 0x4, scoped, tag = 'scoped memory for tpu_custom_call.1']
    #allocation6 [shape = 'u8[512]{0}', space=vmem, size = 0x400, scoped, tag = 'output window, operand 0, single buffered']
    #allocation7 [shape = 'u8[2048]{0}', space=vmem, size = 0x800, scoped, tag = 'output window, operand 1, single buffered']
    #allocation8 [shape = 's32[1]{0}', space=sflag, size = 0x4, scoped, tag = 'scoped memory for tpu_custom_call.1']
    %9 = vsyncpa [#allocation4], 0
    %10 = vsyncpa [#allocation5], 0
    %11 = vsyncpa [#allocation8], 0
    // Predicated region
    $region2: #{tpu_custom_call.1} parent=1 // pred_check
      _
    $region3: #{tpu_custom_call.1} parent=1 // pred_check_branch
      %13 = sbr.rel (0) target = $region5
    $region4: #{tpu_custom_call.1} parent=1 // pred_region
      %s15 = ssub.s32 256, 256
      %16 = vsyncadd [#allocation4], %s15
      %s18 = sshll.u32 [#allocation3], 4
      %s19 = int_to_ptr.vmem [resolvable:$true] %s18
      %21 = dma.hbm_to_vmem [thread:$0]  %s0, 256, %s19, [#allocation4]
    $region5: #{tpu_custom_call.1} parent=1 // pred_fallthru
      _
    // Predicated region
    $region6: #{tpu_custom_call.1} parent=1 // pred_check
      _
    $region7: #{tpu_custom_call.1} parent=1 // pred_check_branch
      %23 = sbr.rel (0) target = $region9
    $region8: #{tpu_custom_call.1} parent=1 // pred_region
      %24 = dma.done [#allocation4], 256
    $region9: #{tpu_custom_call.1} parent=1 // pred_fallthru
      _
    %v25 = vld [vmem:[#allocation3] sm:$0xff]
    %26 = vxpose.xlu0.b32.start [1/16] %v25, 128
    %27 = vxpose.xlu0.b32.cont [2/16] 0.0, 128
    %28 = vxpose.xlu0.b32.cont [3/16] 0.0, 128
    %29 = vxpose.xlu0.b32.cont [4/16] 0.0, 128
    %30 = vxpose.xlu0.b32.cont [5/16] 0.0, 128
    %31 = vxpose.xlu0.b32.cont [6/16] 0.0, 128
    %32 = vxpose.xlu0.b32.cont [7/16] 0.0, 128
    %33 = vxpose.xlu0.b32.cont [8/16] 0.0, 128
    %34 = vxpose.xlu0.b32.cont [9/16] 0.0, 128
    %35 = vxpose.xlu0.b32.cont [10/16] 0.0, 128
    %36 = vxpose.xlu0.b32.cont [11/16] 0.0, 128
    %37 = vxpose.xlu0.b32.cont [12/16] 0.0, 128
    %38 = vxpose.xlu0.b32.cont [13/16] 0.0, 128
    %39 = vxpose.xlu0.b32.cont [14/16] 0.0, 128
    %40 = vxpose.xlu0.b32.cont [15/16] 0.0, 128
    %41 = vxpose.xlu0.b32.end [16/16] 0.0, 128
    %v42 = vpop.trf.xlu0
    %v43 = vpop.trf.xlu0
    %v44 = vpop.trf.xlu0
    %v45 = vpop.trf.xlu0
    %v46 = vpop.trf.xlu0
    %v47 = vpop.trf.xlu0
    %v48 = vpop.trf.xlu0
    %v49 = vpop.trf.xlu0
    %v50 = vpop.trf.xlu0
    %v51 = vpop.trf.xlu0
    %v52 = vpop.trf.xlu0
    %v53 = vpop.trf.xlu0
    %v54 = vpop.trf.xlu0
    %v55 = vpop.trf.xlu0
    %v56 = vpop.trf.xlu0
    %v57 = vpop.trf.xlu0
    %vm58 = vcmask 64512
    %59 = vst.msk [vmem:[#allocation2] sm:$0xff] %vm58, %v42
    %60 = vst.msk [vmem:[#allocation2 + $0x8] sm:$0xff] %vm58, %v43
    %61 = vst.msk [vmem:[#allocation2 + $0x10] sm:$0xff] %vm58, %v44
    %62 = vst.msk [vmem:[#allocation2 + $0x18] sm:$0xff] %vm58, %v45
    %63 = vst.msk [vmem:[#allocation2 + $0x20] sm:$0xff] %vm58, %v46
    %64 = vst.msk [vmem:[#allocation2 + $0x28] sm:$0xff] %vm58, %v47
    %65 = vst.msk [vmem:[#allocation2 + $0x30] sm:$0xff] %vm58, %v48
    %66 = vst.msk [vmem:[#allocation2 + $0x38] sm:$0xff] %vm58, %v49
    %67 = vst.msk [vmem:[#allocation2 + $0x40] sm:$0xff] %vm58, %v50
    %68 = vst.msk [vmem:[#allocation2 + $0x48] sm:$0xff] %vm58, %v51
    %69 = vst.msk [vmem:[#allocation2 + $0x50] sm:$0xff] %vm58, %v52
    %70 = vst.msk [vmem:[#allocation2 + $0x58] sm:$0xff] %vm58, %v53
    %71 = vst.msk [vmem:[#allocation2 + $0x60] sm:$0xff] %vm58, %v54
    %72 = vst.msk [vmem:[#allocation2 + $0x68] sm:$0xff] %vm58, %v55
    %73 = vst.msk [vmem:[#allocation2 + $0x70] sm:$0xff] %vm58, %v56
    %74 = vst.msk [vmem:[#allocation2 + $0x78] sm:$0xff] %vm58, %v57
    %v75 = vld [vmem:[#allocation3 + $0x8] sm:$0xff]
    %76 = vxpose.xlu0.b32.start [1/16] %v75, 128
    %77 = vxpose.xlu0.b32.cont [2/16] 0.0, 128
    %78 = vxpose.xlu0.b32.cont [3/16] 0.0, 128
    %79 = vxpose.xlu0.b32.cont [4/16] 0.0, 128
    %80 = vxpose.xlu0.b32.cont [5/16] 0.0, 128
    %81 = vxpose.xlu0.b32.cont [6/16] 0.0, 128
    %82 = vxpose.xlu0.b32.cont [7/16] 0.0, 128
    %83 = vxpose.xlu0.b32.cont [8/16] 0.0, 128
    %84 = vxpose.xlu0.b32.cont [9/16] 0.0, 128
    %85 = vxpose.xlu0.b32.cont [10/16] 0.0, 128
    %86 = vxpose.xlu0.b32.cont [11/16] 0.0, 128
    %87 = vxpose.xlu0.b32.cont [12/16] 0.0, 128
    %88 = vxpose.xlu0.b32.cont [13/16] 0.0, 128
    %89 = vxpose.xlu0.b32.cont [14/16] 0.0, 128
    %90 = vxpose.xlu0.b32.cont [15/16] 0.0, 128
    %91 = vxpose.xlu0.b32.end [16/16] 0.0, 128
    %v92 = vpop.trf.xlu0
    %v93 = vpop.trf.xlu0
    %v94 = vpop.trf.xlu0
    %v95 = vpop.trf.xlu0
    %v96 = vpop.trf.xlu0
    %v97 = vpop.trf.xlu0
    %v98 = vpop.trf.xlu0
    %v99 = vpop.trf.xlu0
    %v100 = vpop.trf.xlu0
    %v101 = vpop.trf.xlu0
    %v102 = vpop.trf.xlu0
    %v103 = vpop.trf.xlu0
    %v104 = vpop.trf.xlu0
    %v105 = vpop.trf.xlu0
    %v106 = vpop.trf.xlu0
    %v107 = vpop.trf.xlu0
    %108 = vst.msk [vmem:[#allocation2 + $0x80] sm:$0xff] %vm58, %v92
    %109 = vst.msk [vmem:[#allocation2 + $0x88] sm:$0xff] %vm58, %v93
    %110 = vst.msk [vmem:[#allocation2 + $0x90] sm:$0xff] %vm58, %v94
    %111 = vst.msk [vmem:[#allocation2 + $0x98] sm:$0xff] %vm58, %v95
    %112 = vst.msk [vmem:[#allocation2 + $0xa0] sm:$0xff] %vm58, %v96
    %113 = vst.msk [vmem:[#allocation2 + $0xa8] sm:$0xff] %vm58, %v97
    %114 = vst.msk [vmem:[#allocation2 + $0xb0] sm:$0xff] %vm58, %v98
    %115 = vst.msk [vmem:[#allocation2 + $0xb8] sm:$0xff] %vm58, %v99
    %116 = vst.msk [vmem:[#allocation2 + $0xc0] sm:$0xff] %vm58, %v100
    %117 = vst.msk [vmem:[#allocation2 + $0xc8] sm:$0xff] %vm58, %v101
    %118 = vst.msk [vmem:[#allocation2 + $0xd0] sm:$0xff] %vm58, %v102
    %119 = vst.msk [vmem:[#allocation2 + $0xd8] sm:$0xff] %vm58, %v103
    %120 = vst.msk [vmem:[#allocation2 + $0xe0] sm:$0xff] %vm58, %v104
    %121 = vst.msk [vmem:[#allocation2 + $0xe8] sm:$0xff] %vm58, %v105
    %122 = vst.msk [vmem:[#allocation2 + $0xf0] sm:$0xff] %vm58, %v106
    %123 = vst.msk [vmem:[#allocation2 + $0xf8] sm:$0xff] %vm58, %v107
    %v124 = vld [vmem:[#allocation2] sm:$0xff]
    %v125 = vld [vmem:[#allocation2 + $0x8] sm:$0xff]
    %v126 = vld [vmem:[#allocation2 + $0x10] sm:$0xff]
    %v127 = vld [vmem:[#allocation2 + $0x18] sm:$0xff]
    %v128 = vmax.f32 %v124, %v126
    %v129 = vmax.f32 %v125, %v127
    %v130 = vld [vmem:[#allocation2 + $0x20] sm:$0xff]
    %v131 = vld [vmem:[#allocation2 + $0x28] sm:$0xff]
    %v132 = vmax.f32 %v128, %v130
    %v133 = vmax.f32 %v129, %v131
    %v134 = vld [vmem:[#allocation2 + $0x30] sm:$0xff]
    %v135 = vld [vmem:[#allocation2 + $0x38] sm:$0xff]
    %v136 = vmax.f32 %v132, %v134
    %v137 = vmax.f32 %v133, %v135
    %v138 = vld [vmem:[#allocation2 + $0x40] sm:$0xff]
    %v139 = vld [vmem:[#allocation2 + $0x48] sm:$0xff]
    %v140 = vmax.f32 %v136, %v138
    %v141 = vmax.f32 %v137, %v139
    %v142 = vld [vmem:[#allocation2 + $0x50] sm:$0xff]
    %v143 = vld [vmem:[#allocation2 + $0x58] sm:$0xff]
    %v144 = vmax.f32 %v140, %v142
    %v145 = vmax.f32 %v141, %v143
    %v146 = vld [vmem:[#allocation2 + $0x60] sm:$0xff]
    %v147 = vld [vmem:[#allocation2 + $0x68] sm:$0xff]
    %v148 = vmax.f32 %v144, %v146
    %v149 = vmax.f32 %v145, %v147
    %v150 = vld [vmem:[#allocation2 + $0x70] sm:$0xff]
    %v151 = vld [vmem:[#allocation2 + $0x78] sm:$0xff]
    %v152 = vmax.f32 %v148, %v150
    %v153 = vmax.f32 %v149, %v151
    %v154 = vld [vmem:[#allocation2 + $0x80] sm:$0xff]
    %v155 = vld [vmem:[#allocation2 + $0x88] sm:$0xff]
    %v156 = vmax.f32 %v152, %v154
    %v157 = vmax.f32 %v153, %v155
    %v158 = vld [vmem:[#allocation2 + $0x90] sm:$0xff]
    %v159 = vld [vmem:[#allocation2 + $0x98] sm:$0xff]
    %v160 = vmax.f32 %v156, %v158
    %v161 = vmax.f32 %v157, %v159
    %v162 = vld [vmem:[#allocation2 + $0xa0] sm:$0xff]
    %v163 = vld [vmem:[#allocation2 + $0xa8] sm:$0xff]
    %v164 = vmax.f32 %v160, %v162
    %v165 = vmax.f32 %v161, %v163
    %v166 = vld [vmem:[#allocation2 + $0xb0] sm:$0xff]
    %v167 = vld [vmem:[#allocation2 + $0xb8] sm:$0xff]
    %v168 = vmax.f32 %v164, %v166
    %v169 = vmax.f32 %v165, %v167
    %v170 = vld [vmem:[#allocation2 + $0xc0] sm:$0xff]
    %v171 = vld [vmem:[#allocation2 + $0xc8] sm:$0xff]
    %v172 = vmax.f32 %v168, %v170
    %v173 = vmax.f32 %v169, %v171
    %v174 = vld [vmem:[#allocation2 + $0xd0] sm:$0xff]
    %v175 = vld [vmem:[#allocation2 + $0xd8] sm:$0xff]
    %v176 = vmax.f32 %v172, %v174
    %v177 = vmax.f32 %v173, %v175
    %v178 = vld [vmem:[#allocation2 + $0xe0] sm:$0xff]
    %v179 = vld [vmem:[#allocation2 + $0xe8] sm:$0xff]
    %v180 = vmax.f32 %v176, %v178
    %v181 = vmax.f32 %v177, %v179
    %v182 = vld [vmem:[#allocation2 + $0xf0] sm:$0xff]
    %v183 = vld [vmem:[#allocation2 + $0xf8] sm:$0xff]
    %v184 = vmax.f32 %v180, %v182
    %v185 = vmax.f32 %v181, %v183
    %v186 = vsel %vm58, %v184, -inf
    %v187 = vsel %vm58, %v185, -inf
    %v188 = vmax.f32 %v186, %v187
    %v189 = vrot.slane %v188, 4
    %v190 = vmax.f32 %v188, %v189
    %v191 = vrot.slane %v190, 2
    %v192 = vmax.f32 %v190, %v191
    %v193 = vrot.slane %v192, 1
    %v194 = vmax.f32 %v192, %v193
    %vm195 = vcmask 57344
    %196 = vst.msk [vmem:[#allocation6] sm:$0x1] %vm195, %v194
    %v197 = vld [vmem:[#allocation2] sm:$0xff]
    %v198 = vld [vmem:[#allocation2 + $0x10] sm:$0xff]
    %v199 = vmax.f32 %v197, %v198
    %v200 = vld [vmem:[#allocation2 + $0x20] sm:$0xff]
    %v201 = vmax.f32 %v199, %v200
    %v202 = vld [vmem:[#allocation2 + $0x30] sm:$0xff]
    %v203 = vmax.f32 %v201, %v202
    %v204 = vld [vmem:[#allocation2 + $0x40] sm:$0xff]
    %v205 = vmax.f32 %v203, %v204
    %v206 = vld [vmem:[#allocation2 + $0x50] sm:$0xff]
    %v207 = vmax.f32 %v205, %v206
    %v208 = vld [vmem:[#allocation2 + $0x60] sm:$0xff]
    %v209 = vmax.f32 %v207, %v208
    %v210 = vld [vmem:[#allocation2 + $0x70] sm:$0xff]
    %v211 = vmax.f32 %v209, %v210
    %v212 = vsel %vm58, %v211, -inf
    %v213 = vrot.slane %v212, 4
    %v214 = vmax.f32 %v212, %v213
    %v215 = vrot.slane %v214, 2
    %v216 = vmax.f32 %v214, %v215
    %v217 = vrot.slane %v216, 1
    %v218 = vmax.f32 %v216, %v217
    %219 = vst.msk [vmem:[#allocation7] sm:$0x1] %vm195, %v218
    %v220 = vld [vmem:[#allocation2 + $0x8] sm:$0xff]
    %v221 = vld [vmem:[#allocation2 + $0x18] sm:$0xff]
    %v222 = vmax.f32 %v220, %v221
    %v223 = vld [vmem:[#allocation2 + $0x28] sm:$0xff]
    %v224 = vmax.f32 %v222, %v223
    %v225 = vld [vmem:[#allocation2 + $0x38] sm:$0xff]
    %v226 = vmax.f32 %v224, %v225
    %v227 = vld [vmem:[#allocation2 + $0x48] sm:$0xff]
    %v228 = vmax.f32 %v226, %v227
    %v229 = vld [vmem:[#allocation2 + $0x58] sm:$0xff]
    %v230 = vmax.f32 %v228, %v229
    %v231 = vld [vmem:[#allocation2 + $0x68] sm:$0xff]
    %v232 = vmax.f32 %v230, %v231
    %v233 = vld [vmem:[#allocation2 + $0x78] sm:$0xff]
    %v234 = vmax.f32 %v232, %v233
    %v235 = vsel %vm58, %v234, -inf
    %v236 = vrot.slane %v235, 4
    %v237 = vmax.f32 %v235, %v236
    %v238 = vrot.slane %v237, 2
    %v239 = vmax.f32 %v237, %v238
    %v240 = vrot.slane %v239, 1
    %v241 = vmax.f32 %v239, %v240
    %242 = vst.msk [vmem:[#allocation7 + $0x1] sm:$0x1] %vm195, %v241
    %v243 = vld [vmem:[#allocation2 + $0x80] sm:$0xff]
    %v244 = vld [vmem:[#allocation2 + $0x90] sm:$0xff]
    %v245 = vmax.f32 %v243, %v244
    %v246 = vld [vmem:[#allocation2 + $0xa0] sm:$0xff]
    %v247 = vmax.f32 %v245, %v246
    %v248 = vld [vmem:[#allocation2 + $0xb0] sm:$0xff]
    %v249 = vmax.f32 %v247, %v248
    %v250 = vld [vmem:[#allocation2 + $0xc0] sm:$0xff]
    %v251 = vmax.f32 %v249, %v250
    %v252 = vld [vmem:[#allocation2 + $0xd0] sm:$0xff]
    %v253 = vmax.f32 %v251, %v252
    %v254 = vld [vmem:[#allocation2 + $0xe0] sm:$0xff]
    %v255 = vmax.f32 %v253, %v254
    %v256 = vld [vmem:[#allocation2 + $0xf0] sm:$0xff]
    %v257 = vmax.f32 %v255, %v256
    %v258 = vsel %vm58, %v257, -inf
    %v259 = vrot.slane %v258, 4
    %v260 = vmax.f32 %v258, %v259
    %v261 = vrot.slane %v260, 2
    %v262 = vmax.f32 %v260, %v261
    %v263 = vrot.slane %v262, 1
    %v264 = vmax.f32 %v262, %v263
    %265 = vst.msk [vmem:[#allocation7 + $0x2] sm:$0x1] %vm195, %v264
    %v266 = vld [vmem:[#allocation2 + $0x88] sm:$0xff]
    %v267 = vld [vmem:[#allocation2 + $0x98] sm:$0xff]
    %v268 = vmax.f32 %v266, %v267
    %v269 = vld [vmem:[#allocation2 + $0xa8] sm:$0xff]
    %v270 = vmax.f32 %v268, %v269
    %v271 = vld [vmem:[#allocation2 + $0xb8] sm:$0xff]
    %v272 = vmax.f32 %v270, %v271
    %v273 = vld [vmem:[#allocation2 + $0xc8] sm:$0xff]
    %v274 = vmax.f32 %v272, %v273
    %v275 = vld [vmem:[#allocation2 + $0xd8] sm:$0xff]
    %v276 = vmax.f32 %v274, %v275
    %v277 = vld [vmem:[#allocation2 + $0xe8] sm:$0xff]
    %v278 = vmax.f32 %v276, %v277
    %v279 = vld [vmem:[#allocation2 + $0xf8] sm:$0xff]
    %v280 = vmax.f32 %v278, %v279
    %v281 = vsel %vm58, %v280, -inf
    %v282 = vrot.slane %v281, 4
    %v283 = vmax.f32 %v281, %v282
    %v284 = vrot.slane %v283, 2
    %v285 = vmax.f32 %v283, %v284
    %v286 = vrot.slane %v285, 1
    %v287 = vmax.f32 %v285, %v286
    %288 = vst.msk [vmem:[#allocation7 + $0x3] sm:$0x1] %vm195, %v287
    %v289 = vld [vmem:[#allocation2] sm:$0xf]
    %v290 = vld [vmem:[#allocation2 + $0x10] sm:$0xf]
    %v291 = vmax.f32 %v289, %v290
    %v292 = vld [vmem:[#allocation2 + $0x20] sm:$0xf]
    %v293 = vmax.f32 %v291, %v292
    %v294 = vld [vmem:[#allocation2 + $0x30] sm:$0xf]
    %v295 = vmax.f32 %v293, %v294
    %vm296 = vcmask 60416
    %v297 = vsel %vm296, %v295, -inf
    %v298 = vrot.slane %v297, 4
    %v299 = vmax.f32 %v297, %v298
    %v300 = vrot.slane %v299, 2
    %v301 = vmax.f32 %v299, %v300
    %v302 = vrot.slane %v301, 1
    %v303 = vmax.f32 %v301, %v302
    %304 = vst.msk [vmem:[%s3] sm:$0x1] %vm195, %v303
    %v305 = vld [vmem:[#allocation2 + $0x4] sm:$0xf]
    %v306 = vld [vmem:[#allocation2 + $0x14] sm:$0xf]
    %v307 = vmax.f32 %v305, %v306
    %v308 = vld [vmem:[#allocation2 + $0x24] sm:$0xf]
    %v309 = vmax.f32 %v307, %v308
    %v310 = vld [vmem:[#allocation2 + $0x34] sm:$0xf]
    %v311 = vmax.f32 %v309, %v310
    %v312 = vsel %vm296, %v311, -inf
    %v313 = vrot.slane %v312, 4
    %v314 = vmax.f32 %v312, %v313
    %v315 = vrot.slane %v314, 2
    %v316 = vmax.f32 %v314, %v315
    %v317 = vrot.slane %v316, 1
    %v318 = vmax.f32 %v316, %v317
    %319 = vst.msk [vmem:[%s3 + $0x1] sm:$0x1] %vm195, %v318
    %v320 = vld [vmem:[#allocation2 + $0x8] sm:$0xf]
    %v321 = vld [vmem:[#allocation2 + $0x18] sm:$0xf]
    %v322 = vmax.f32 %v320, %v321
    %v323 = vld [vmem:[#allocation2 + $0x28] sm:$0xf]
    %v324 = vmax.f32 %v322, %v323
    %v325 = vld [vmem:[#allocation2 + $0x38] sm:$0xf]
    %v326 = vmax.f32 %v324, %v325
    %v327 = vsel %vm296, %v326, -inf
    %v328 = vrot.slane %v327, 4
    %v329 = vmax.f32 %v327, %v328
    %v330 = vrot.slane %v329, 2
    %v331 = vmax.f32 %v329, %v330
    %v332 = vrot.slane %v331, 1
    %v333 = vmax.f32 %v331, %v332
    %334 = vst.msk [vmem:[%s3 + $0x2] sm:$0x1] %vm195, %v333
    %v335 = vld [vmem:[#allocation2 + $0xc] sm:$0xf]
    %v336 = vld [vmem:[#allocation2 + $0x1c] sm:$0xf]
    %v337 = vmax.f32 %v335, %v336
    %v338 = vld [vmem:[#allocation2 + $0x2c] sm:$0xf]
    %v339 = vmax.f32 %v337, %v338
    %v340 = vld [vmem:[#allocation2 + $0x3c] sm:$0xf]
    %v341 = vmax.f32 %v339, %v340
    %v342 = vsel %vm296, %v341, -inf
    %v343 = vrot.slane %v342, 4
    %v344 = vmax.f32 %v342, %v343
    %v345 = vrot.slane %v344, 2
    %v346 = vmax.f32 %v344, %v345
    %v347 = vrot.slane %v346, 1
    %v348 = vmax.f32 %v346, %v347
    %349 = vst.msk [vmem:[%s3 + $0x3] sm:$0x1] %vm195, %v348
    %v350 = vld [vmem:[#allocation2 + $0x40] sm:$0xf]
    %v351 = vld [vmem:[#allocation2 + $0x50] sm:$0xf]
    %v352 = vmax.f32 %v350, %v351
    %v353 = vld [vmem:[#allocation2 + $0x60] sm:$0xf]
    %v354 = vmax.f32 %v352, %v353
    %v355 = vld [vmem:[#allocation2 + $0x70] sm:$0xf]
    %v356 = vmax.f32 %v354, %v355
    %v357 = vsel %vm296, %v356, -inf
    %v358 = vrot.slane %v357, 4
    %v359 = vmax.f32 %v357, %v358
    %v360 = vrot.slane %v359, 2
    %v361 = vmax.f32 %v359, %v360
    %v362 = vrot.slane %v361, 1
    %v363 = vmax.f32 %v361, %v362
    %364 = vst.msk [vmem:[%s3 + $0x4] sm:$0x1] %vm195, %v363
    %v365 = vld [vmem:[#allocation2 + $0x44] sm:$0xf]
    %v366 = vld [vmem:[#allocation2 + $0x54] sm:$0xf]
    %v367 = vmax.f32 %v365, %v366
    %v368 = vld [vmem:[#allocation2 + $0x64] sm:$0xf]
    %v369 = vmax.f32 %v367, %v368
    %v370 = vld [vmem:[#allocation2 + $0x74] sm:$0xf]
    %v371 = vmax.f32 %v369, %v370
    %v372 = vsel %vm296, %v371, -inf
    %v373 = vrot.slane %v372, 4
    %v374 = vmax.f32 %v372, %v373
    %v375 = vrot.slane %v374, 2
    %v376 = vmax.f32 %v374, %v375
    %v377 = vrot.slane %v376, 1
    %v378 = vmax.f32 %v376, %v377
    %379 = vst.msk [vmem:[%s3 + $0x5] sm:$0x1] %vm195, %v378
    %v380 = vld [vmem:[#allocation2 + $0x48] sm:$0xf]
    %v381 = vld [vmem:[#allocation2 + $0x58] sm:$0xf]
    %v382 = vmax.f32 %v380, %v381
    %v383 = vld [vmem:[#allocation2 + $0x68] sm:$0xf]
    %v384 = vmax.f32 %v382, %v383
    %v385 = vld [vmem:[#allocation2 + $0x78] sm:$0xf]
    %v386 = vmax.f32 %v384, %v385
    %v387 = vsel %vm296, %v386, -inf
    %v388 = vrot.slane %v387, 4
    %v389 = vmax.f32 %v387, %v388
    %v390 = vrot.slane %v389, 2
    %v391 = vmax.f32 %v389, %v390
    %v392 = vrot.slane %v391, 1
    %v393 = vmax.f32 %v391, %v392
    %394 = vst.msk [vmem:[%s3 + $0x6] sm:$0x1] %vm195, %v393
    %v395 = vld [vmem:[#allocation2 + $0x4c] sm:$0xf]
    %v396 = vld [vmem:[#allocation2 + $0x5c] sm:$0xf]
    %v397 = vmax.f32 %v395, %v396
    %v398 = vld [vmem:[#allocation2 + $0x6c] sm:$0xf]
    %v399 = vmax.f32 %v397, %v398
    %v400 = vld [vmem:[#allocation2 + $0x7c] sm:$0xf]
    %v401 = vmax.f32 %v399, %v400
    %v402 = vsel %vm296, %v401, -inf
    %v403 = vrot.slane %v402, 4
    %v404 = vmax.f32 %v402, %v403
    %v405 = vrot.slane %v404, 2
    %v406 = vmax.f32 %v404, %v405
    %v407 = vrot.slane %v406, 1
    %v408 = vmax.f32 %v406, %v407
    %409 = vst.msk [vmem:[%s3 + $0x7] sm:$0x1] %vm195, %v408
    %v410 = vld [vmem:[#allocation2 + $0x80] sm:$0xf]
    %v411 = vld [vmem:[#allocation2 + $0x90] sm:$0xf]
    %v412 = vmax.f32 %v410, %v411
    %v413 = vld [vmem:[#allocation2 + $0xa0] sm:$0xf]
    %v414 = vmax.f32 %v412, %v413
    %v415 = vld [vmem:[#allocation2 + $0xb0] sm:$0xf]
    %v416 = vmax.f32 %v414, %v415
    %v417 = vsel %vm296, %v416, -inf
    %v418 = vrot.slane %v417, 4
    %v419 = vmax.f32 %v417, %v418
    %v420 = vrot.slane %v419, 2
    %v421 = vmax.f32 %v419, %v420
    %v422 = vrot.slane %v421, 1
    %v423 = vmax.f32 %v421, %v422
    %424 = vst.msk [vmem:[%s3 + $0x8] sm:$0x1] %vm195, %v423
    %v425 = vld [vmem:[#allocation2 + $0x84] sm:$0xf]
    %v426 = vld [vmem:[#allocation2 + $0x94] sm:$0xf]
    %v427 = vmax.f32 %v425, %v426
    %v428 = vld [vmem:[#allocation2 + $0xa4] sm:$0xf]
    %v429 = vmax.f32 %v427, %v428
    %v430 = vld [vmem:[#allocation2 + $0xb4] sm:$0xf]
    %v431 = vmax.f32 %v429, %v430
    %v432 = vsel %vm296, %v431, -inf
    %v433 = vrot.slane %v432, 4
    %v434 = vmax.f32 %v432, %v433
    %v435 = vrot.slane %v434, 2
    %v436 = vmax.f32 %v434, %v435
    %v437 = vrot.slane %v436, 1
    %v438 = vmax.f32 %v436, %v437
    %439 = vst.msk [vmem:[%s3 + $0x9] sm:$0x1] %vm195, %v438
    %v440 = vld [vmem:[#allocation2 + $0x88] sm:$0xf]
    %v441 = vld [vmem:[#allocation2 + $0x98] sm:$0xf]
    %v442 = vmax.f32 %v440, %v441
    %v443 = vld [vmem:[#allocation2 + $0xa8] sm:$0xf]
    %v444 = vmax.f32 %v442, %v443
    %v445 = vld [vmem:[#allocation2 + $0xb8] sm:$0xf]
    %v446 = vmax.f32 %v444, %v445
    %v447 = vsel %vm296, %v446, -inf
    %v448 = vrot.slane %v447, 4
    %v449 = vmax.f32 %v447, %v448
    %v450 = vrot.slane %v449, 2
    %v451 = vmax.f32 %v449, %v450
    %v452 = vrot.slane %v451, 1
    %v453 = vmax.f32 %v451, %v452
    %454 = vst.msk [vmem:[%s3 + $0xa] sm:$0x1] %vm195, %v453
    %v455 = vld [vmem:[#allocation2 + $0x8c] sm:$0xf]
    %v456 = vld [vmem:[#allocation2 + $0x9c] sm:$0xf]
    %v457 = vmax.f32 %v455, %v456
    %v458 = vld [vmem:[#allocation2 + $0xac] sm:$0xf]
    %v459 = vmax.f32 %v457, %v458
    %v460 = vld [vmem:[#allocation2 + $0xbc] sm:$0xf]
    %v461 = vmax.f32 %v459, %v460
    %v462 = vsel %vm296, %v461, -inf
    %v463 = vrot.slane %v462, 4
    %v464 = vmax.f32 %v462, %v463
    %v465 = vrot.slane %v464, 2
    %v466 = vmax.f32 %v464, %v465
    %v467 = vrot.slane %v466, 1
    %v468 = vmax.f32 %v466, %v467
    %469 = vst.msk [vmem:[%s3 + $0xb] sm:$0x1] %vm195, %v468
    %v470 = vld [vmem:[#allocation2 + $0xc0] sm:$0xf]
    %v471 = vld [vmem:[#allocation2 + $0xd0] sm:$0xf]
    %v472 = vmax.f32 %v470, %v471
    %v473 = vld [vmem:[#allocation2 + $0xe0] sm:$0xf]
    %v474 = vmax.f32 %v472, %v473
    %v475 = vld [vmem:[#allocation2 + $0xf0] sm:$0xf]
    %v476 = vmax.f32 %v474, %v475
    %v477 = vsel %vm296, %v476, -inf
    %v478 = vrot.slane %v477, 4
    %v479 = vmax.f32 %v477, %v478
    %v480 = vrot.slane %v479, 2
    %v481 = vmax.f32 %v479, %v480
    %v482 = vrot.slane %v481, 1
    %v483 = vmax.f32 %v481, %v482
    %484 = vst.msk [vmem:[%s3 + $0xc] sm:$0x1] %vm195, %v483
    %v485 = vld [vmem:[#allocation2 + $0xc4] sm:$0xf]
    %v486 = vld [vmem:[#allocation2 + $0xd4] sm:$0xf]
    %v487 = vmax.f32 %v485, %v486
    %v488 = vld [vmem:[#allocation2 + $0xe4] sm:$0xf]
    %v489 = vmax.f32 %v487, %v488
    %v490 = vld [vmem:[#allocation2 + $0xf4] sm:$0xf]
    %v491 = vmax.f32 %v489, %v490
    %v492 = vsel %vm296, %v491, -inf
    %v493 = vrot.slane %v492, 4
    %v494 = vmax.f32 %v492, %v493
    %v495 = vrot.slane %v494, 2
    %v496 = vmax.f32 %v494, %v495
    %v497 = vrot.slane %v496, 1
    %v498 = vmax.f32 %v496, %v497
    %499 = vst.msk [vmem:[%s3 + $0xd] sm:$0x1] %vm195, %v498
    %v500 = vld [vmem:[#allocation2 + $0xc8] sm:$0xf]
    %v501 = vld [vmem:[#allocation2 + $0xd8] sm:$0xf]
    %v502 = vmax.f32 %v500, %v501
    %v503 = vld [vmem:[#allocation2 + $0xe8] sm:$0xf]
    %v504 = vmax.f32 %v502, %v503
    %v505 = vld [vmem:[#allocation2 + $0xf8] sm:$0xf]
    %v506 = vmax.f32 %v504, %v505
    %v507 = vsel %vm296, %v506, -inf
    %v508 = vrot.slane %v507, 4
    %v509 = vmax.f32 %v507, %v508
    %v510 = vrot.slane %v509, 2
    %v511 = vmax.f32 %v509, %v510
    %v512 = vrot.slane %v511, 1
    %v513 = vmax.f32 %v511, %v512
    %514 = vst.msk [vmem:[%s3 + $0xe] sm:$0x1] %vm195, %v513
    %v515 = vld [vmem:[#allocation2 + $0xcc] sm:$0xf]
    %v516 = vld [vmem:[#allocation2 + $0xdc] sm:$0xf]
    %v517 = vmax.f32 %v515, %v516
    %v518 = vld [vmem:[#allocation2 + $0xec] sm:$0xf]
    %v519 = vmax.f32 %v517, %v518
    %v520 = vld [vmem:[#allocation2 + $0xfc] sm:$0xf]
    %v521 = vmax.f32 %v519, %v520
    %v522 = vsel %vm296, %v521, -inf
    %v523 = vrot.slane %v522, 4
    %v524 = vmax.f32 %v522, %v523
    %v525 = vrot.slane %v524, 2
    %v526 = vmax.f32 %v524, %v525
    %v527 = vrot.slane %v526, 1
    %v528 = vmax.f32 %v526, %v527
    %529 = vst.msk [vmem:[%s3 + $0xf] sm:$0x1] %vm195, %v528
    // Predicated region
    $region10: #{tpu_custom_call.1} parent=1 // pred_check
      _
    $region11: #{tpu_custom_call.1} parent=1 // pred_check_branch
      %531 = sbr.rel (0) target = $region13
    $region12: #{tpu_custom_call.1} parent=1 // pred_region
      %s533 = ssub.s32 16, 16
      %534 = vsyncadd [#allocation5], %s533
      %s536 = sshll.u32 [#allocation6], 4
      %s537 = int_to_ptr.vmem [resolvable:$true] %s536
      %539 = dma.vmem_to_hbm [thread:$0]  %s537, 16, %s1, [#allocation5]
    $region13: #{tpu_custom_call.1} parent=1 // pred_fallthru
      _
    // Predicated region
    $region14: #{tpu_custom_call.1} parent=1 // pred_check
      _
    $region15: #{tpu_custom_call.1} parent=1 // pred_check_branch
      %541 = sbr.rel (0) target = $region17
    $region16: #{tpu_custom_call.1} parent=1 // pred_region
      %s543 = ssub.s32 64, 64
      %544 = vsyncadd [#allocation8], %s543
      %s546 = sshll.u32 [#allocation7], 4
      %s547 = int_to_ptr.vmem [resolvable:$true] %s546
      %549 = dma.vmem_to_hbm [thread:$0]  %s547, 64, %s2, [#allocation8]
    $region17: #{tpu_custom_call.1} parent=1 // pred_fallthru
      _
    // Predicated region
    $region18: #{tpu_custom_call.1} parent=1 // pred_check
      _
    $region19: #{tpu_custom_call.1} parent=1 // pred_check_branch
      %551 = sbr.rel (0) target = $region21
    $region20: #{tpu_custom_call.1} parent=1 // pred_region
      _
    $region21: #{tpu_custom_call.1} parent=1 // pred_fallthru
      _
    // Predicated region
    $region22: #{tpu_custom_call.1} parent=1 // pred_check
      _
    $region23: #{tpu_custom_call.1} parent=1 // pred_check_branch
      %553 = sbr.rel (0) target = $region25
    $region24: #{tpu_custom_call.1} parent=1 // pred_region
      %554 = dma.done [#allocation5], 16
    $region25: #{tpu_custom_call.1} parent=1 // pred_fallthru
      _
    // Predicated region
    $region26: #{tpu_custom_call.1} parent=1 // pred_check
      _
    $region27: #{tpu_custom_call.1} parent=1 // pred_check_branch
      %556 = sbr.rel (0) target = $region29
    $region28: #{tpu_custom_call.1} parent=1 // pred_region
      %557 = dma.done [#allocation8], 64
    $region29: #{tpu_custom_call.1} parent=1 // pred_fallthru
      _
    // Predicated region
    $region30: #{tpu_custom_call.1} parent=1 // pred_check
      _
    $region31: #{tpu_custom_call.1} parent=1 // pred_check_branch
      %559 = sbr.rel (0) target = $region33
    $region32: #{tpu_custom_call.1} parent=1 // pred_region
      _
    $region33: #{tpu_custom_call.1} parent=1 // pred_fallthru
      _
    %560 = vsyncpa [#allocation4], 1
    %561 = vsyncpa [#allocation5], 1
    %562 = vsyncpa [#allocation8], 1

// kernel: tpu_custom_call.1
$region0: #{tpu_custom_call.1}
  #allocation0 [shape = 'u32[]', space=smem, size = 0x4, offset = 0x4, fixed_abs, tag = 'smem constant byte address 0x4 - core index']
  #allocation1 [shape = 'u32[144,128]{1,0:T(1,128)}', space=vmem, size = 0x12000, scoped, tag = 'internal scratch']
  %s0 = inlined_call_operand.vmem [shape: f32[256,8], index: 0, kind: input, shape index: {}]
  %s1 = inlined_call_operand.hbm [shape: f32[1,8], index: 1, kind: output, shape index: {0}]
  %s2 = inlined_call_operand.hbm [shape: f32[4,8], index: 2, kind: output, shape index: {1}]
  %s3 = inlined_call_operand.vmem [shape: f32[16,8], index: 3, kind: output, shape index: {2}]
  %4 = xla_tuple %s1, %s2, %s3
  %s5 = sld [smem:[#allocation0]]
  $region30: #{tpu_custom_call.1} parent=0
    _
  %s7 = ssub.s32 1, %s5
  %s8 = scalar_select 0, %s7, %s5
  $region1: #{tpu_custom_call.1} parent=0
    #allocation2 [shape = 'u8[512]{0}', space=vmem, size = 0x400, scoped, tag = 'output window, operand 0, single buffered']
    #allocation3 [shape = 's32[1]{0}', space=sflag, size = 0x4, scoped, tag = 'scoped memory for tpu_custom_call.1']
    #allocation4 [shape = 'u8[2048]{0}', space=vmem, size = 0x800, scoped, tag = 'output window, operand 1, single buffered']
    #allocation5 [shape = 's32[1]{0}', space=sflag, size = 0x4, scoped, tag = 'scoped memory for tpu_custom_call.1']
    %9 = vsyncpa [#allocation3], 0
    %10 = vsyncpa [#allocation5], 0
    // Predicated region
    $region2: #{tpu_custom_call.1} parent=1 // pred_check
      _
    $region3: #{tpu_custom_call.1} parent=1 // pred_check_branch
      %12 = sbr.rel (0) target = $region5
    $region4: #{tpu_custom_call.1} parent=1 // pred_region
      _
    $region5: #{tpu_custom_call.1} parent=1 // pred_fallthru
      _
    %v13 = vld [vmem:[%s0] sm:$0xff]
    %v14 = vld [vmem:[%s0 + $0x8] sm:$0xff]
    %v15 = vld [vmem:[%s0 + $0x10] sm:$0xff]
    %v16 = vld [vmem:[%s0 + $0x18] sm:$0xff]
    %v17 = vmax.f32 %v13, %v15
    %v18 = vmax.f32 %v14, %v16
    %v19 = vld [vmem:[%s0 + $0x20] sm:$0xff]
    %v20 = vld [vmem:[%s0 + $0x28] sm:$0xff]
    %v21 = vmax.f32 %v17, %v19
    %v22 = vmax.f32 %v18, %v20
    %v23 = vld [vmem:[%s0 + $0x30] sm:$0xff]
    %v24 = vld [vmem:[%s0 + $0x38] sm:$0xff]
    %v25 = vmax.f32 %v21, %v23
    %v26 = vmax.f32 %v22, %v24
    %v27 = vld [vmem:[%s0 + $0x40] sm:$0xff]
    %v28 = vld [vmem:[%s0 + $0x48] sm:$0xff]
    %v29 = vmax.f32 %v25, %v27
    %v30 = vmax.f32 %v26, %v28
    %v31 = vld [vmem:[%s0 + $0x50] sm:$0xff]
    %v32 = vld [vmem:[%s0 + $0x58] sm:$0xff]
    %v33 = vmax.f32 %v29, %v31
    %v34 = vmax.f32 %v30, %v32
    %v35 = vld [vmem:[%s0 + $0x60] sm:$0xff]
    %v36 = vld [vmem:[%s0 + $0x68] sm:$0xff]
    %v37 = vmax.f32 %v33, %v35
    %v38 = vmax.f32 %v34, %v36
    %v39 = vld [vmem:[%s0 + $0x70] sm:$0xff]
    %v40 = vld [vmem:[%s0 + $0x78] sm:$0xff]
    %v41 = vmax.f32 %v37, %v39
    %v42 = vmax.f32 %v38, %v40
    %v43 = vld [vmem:[%s0 + $0x80] sm:$0xff]
    %v44 = vld [vmem:[%s0 + $0x88] sm:$0xff]
    %v45 = vmax.f32 %v41, %v43
    %v46 = vmax.f32 %v42, %v44
    %v47 = vld [vmem:[%s0 + $0x90] sm:$0xff]
    %v48 = vld [vmem:[%s0 + $0x98] sm:$0xff]
    %v49 = vmax.f32 %v45, %v47
    %v50 = vmax.f32 %v46, %v48
    %v51 = vld [vmem:[%s0 + $0xa0] sm:$0xff]
    %v52 = vld [vmem:[%s0 + $0xa8] sm:$0xff]
    %v53 = vmax.f32 %v49, %v51
    %v54 = vmax.f32 %v50, %v52
    %v55 = vld [vmem:[%s0 + $0xb0] sm:$0xff]
    %v56 = vld [vmem:[%s0 + $0xb8] sm:$0xff]
    %v57 = vmax.f32 %v53, %v55
    %v58 = vmax.f32 %v54, %v56
    %v59 = vld [vmem:[%s0 + $0xc0] sm:$0xff]
    %v60 = vld [vmem:[%s0 + $0xc8] sm:$0xff]
    %v61 = vmax.f32 %v57, %v59
    %v62 = vmax.f32 %v58, %v60
    %v63 = vld [vmem:[%s0 + $0xd0] sm:$0xff]
    %v64 = vld [vmem:[%s0 + $0xd8] sm:$0xff]
    %v65 = vmax.f32 %v61, %v63
    %v66 = vmax.f32 %v62, %v64
    %v67 = vld [vmem:[%s0 + $0xe0] sm:$0xff]
    %v68 = vld [vmem:[%s0 + $0xe8] sm:$0xff]
    %v69 = vmax.f32 %v65, %v67
    %v70 = vmax.f32 %v66, %v68
    %v71 = vld [vmem:[%s0 + $0xf0] sm:$0xff]
    %v72 = vld [vmem:[%s0 + $0xf8] sm:$0xff]
    %v73 = vmax.f32 %v69, %v71
    %v74 = vmax.f32 %v70, %v72
    %vm75 = vcmask 64512
    %v76 = vsel %vm75, %v73, -inf
    %v77 = vsel %vm75, %v74, -inf
    %v78 = vmax.f32 %v76, %v77
    %v79 = vrot.slane %v78, 4
    %v80 = vmax.f32 %v78, %v79
    %v81 = vrot.slane %v80, 2
    %v82 = vmax.f32 %v80, %v81
    %v83 = vrot.slane %v82, 1
    %v84 = vmax.f32 %v82, %v83
    %vm85 = vcmask 57344
    %86 = vst.msk [vmem:[#allocation2] sm:$0x1] %vm85, %v84
    %v87 = vld [vmem:[%s0] sm:$0xff]
    %v88 = vld [vmem:[%s0 + $0x10] sm:$0xff]
    %v89 = vmax.f32 %v87, %v88
    %v90 = vld [vmem:[%s0 + $0x20] sm:$0xff]
    %v91 = vmax.f32 %v89, %v90
    %v92 = vld [vmem:[%s0 + $0x30] sm:$0xff]
    %v93 = vmax.f32 %v91, %v92
    %v94 = vld [vmem:[%s0 + $0x40] sm:$0xff]
    %v95 = vmax.f32 %v93, %v94
    %v96 = vld [vmem:[%s0 + $0x50] sm:$0xff]
    %v97 = vmax.f32 %v95, %v96
    %v98 = vld [vmem:[%s0 + $0x60] sm:$0xff]
    %v99 = vmax.f32 %v97, %v98
    %v100 = vld [vmem:[%s0 + $0x70] sm:$0xff]
    %v101 = vmax.f32 %v99, %v100
    %v102 = vsel %vm75, %v101, -inf
    %v103 = vrot.slane %v102, 4
    %v104 = vmax.f32 %v102, %v103
    %v105 = vrot.slane %v104, 2
    %v106 = vmax.f32 %v104, %v105
    %v107 = vrot.slane %v106, 1
    %v108 = vmax.f32 %v106, %v107
    %109 = vst.msk [vmem:[#allocation4] sm:$0x1] %vm85, %v108
    %v110 = vld [vmem:[%s0 + $0x8] sm:$0xff]
    %v111 = vld [vmem:[%s0 + $0x18] sm:$0xff]
    %v112 = vmax.f32 %v110, %v111
    %v113 = vld [vmem:[%s0 + $0x28] sm:$0xff]
    %v114 = vmax.f32 %v112, %v113
    %v115 = vld [vmem:[%s0 + $0x38] sm:$0xff]
    %v116 = vmax.f32 %v114, %v115
    %v117 = vld [vmem:[%s0 + $0x48] sm:$0xff]
    %v118 = vmax.f32 %v116, %v117
    %v119 = vld [vmem:[%s0 + $0x58] sm:$0xff]
    %v120 = vmax.f32 %v118, %v119
    %v121 = vld [vmem:[%s0 + $0x68] sm:$0xff]
    %v122 = vmax.f32 %v120, %v121
    %v123 = vld [vmem:[%s0 + $0x78] sm:$0xff]
    %v124 = vmax.f32 %v122, %v123
    %v125 = vsel %vm75, %v124, -inf
    %v126 = vrot.slane %v125, 4
    %v127 = vmax.f32 %v125, %v126
    %v128 = vrot.slane %v127, 2
    %v129 = vmax.f32 %v127, %v128
    %v130 = vrot.slane %v129, 1
    %v131 = vmax.f32 %v129, %v130
    %132 = vst.msk [vmem:[#allocation4 + $0x1] sm:$0x1] %vm85, %v131
    %v133 = vld [vmem:[%s0 + $0x80] sm:$0xff]
    %v134 = vld [vmem:[%s0 + $0x90] sm:$0xff]
    %v135 = vmax.f32 %v133, %v134
    %v136 = vld [vmem:[%s0 + $0xa0] sm:$0xff]
    %v137 = vmax.f32 %v135, %v136
    %v138 = vld [vmem:[%s0 + $0xb0] sm:$0xff]
    %v139 = vmax.f32 %v137, %v138
    %v140 = vld [vmem:[%s0 + $0xc0] sm:$0xff]
    %v141 = vmax.f32 %v139, %v140
    %v142 = vld [vmem:[%s0 + $0xd0] sm:$0xff]
    %v143 = vmax.f32 %v141, %v142
    %v144 = vld [vmem:[%s0 + $0xe0] sm:$0xff]
    %v145 = vmax.f32 %v143, %v144
    %v146 = vld [vmem:[%s0 + $0xf0] sm:$0xff]
    %v147 = vmax.f32 %v145, %v146
    %v148 = vsel %vm75, %v147, -inf
    %v149 = vrot.slane %v148, 4
    %v150 = vmax.f32 %v148, %v149
    %v151 = vrot.slane %v150, 2
    %v152 = vmax.f32 %v150, %v151
    %v153 = vrot.slane %v152, 1
    %v154 = vmax.f32 %v152, %v153
    %155 = vst.msk [vmem:[#allocation4 + $0x2] sm:$0x1] %vm85, %v154
    %v156 = vld [vmem:[%s0 + $0x88] sm:$0xff]
    %v157 = vld [vmem:[%s0 + $0x98] sm:$0xff]
    %v158 = vmax.f32 %v156, %v157
    %v159 = vld [vmem:[%s0 + $0xa8] sm:$0xff]
    %v160 = vmax.f32 %v158, %v159
    %v161 = vld [vmem:[%s0 + $0xb8] sm:$0xff]
    %v162 = vmax.f32 %v160, %v161
    %v163 = vld [vmem:[%s0 + $0xc8] sm:$0xff]
    %v164 = vmax.f32 %v162, %v163
    %v165 = vld [vmem:[%s0 + $0xd8] sm:$0xff]
    %v166 = vmax.f32 %v164, %v165
    %v167 = vld [vmem:[%s0 + $0xe8] sm:$0xff]
    %v168 = vmax.f32 %v166, %v167
    %v169 = vld [vmem:[%s0 + $0xf8] sm:$0xff]
    %v170 = vmax.f32 %v168, %v169
    %v171 = vsel %vm75, %v170, -inf
    %v172 = vrot.slane %v171, 4
    %v173 = vmax.f32 %v171, %v172
    %v174 = vrot.slane %v173, 2
    %v175 = vmax.f32 %v173, %v174
    %v176 = vrot.slane %v175, 1
    %v177 = vmax.f32 %v175, %v176
    %178 = vst.msk [vmem:[#allocation4 + $0x3] sm:$0x1] %vm85, %v177
    %v179 = vld [vmem:[%s0] sm:$0xf]
    %v180 = vld [vmem:[%s0 + $0x10] sm:$0xf]
    %v181 = vmax.f32 %v179, %v180
    %v182 = vld [vmem:[%s0 + $0x20] sm:$0xf]
    %v183 = vmax.f32 %v181, %v182
    %v184 = vld [vmem:[%s0 + $0x30] sm:$0xf]
    %v185 = vmax.f32 %v183, %v184
    %vm186 = vcmask 60416
    %v187 = vsel %vm186, %v185, -inf
    %v188 = vrot.slane %v187, 4
    %v189 = vmax.f32 %v187, %v188
    %v190 = vrot.slane %v189, 2
    %v191 = vmax.f32 %v189, %v190
    %v192 = vrot.slane %v191, 1
    %v193 = vmax.f32 %v191, %v192
    %194 = vst.msk [vmem:[%s3] sm:$0x1] %vm85, %v193
    %v195 = vld [vmem:[%s0 + $0x4] sm:$0xf]
    %v196 = vld [vmem:[%s0 + $0x14] sm:$0xf]
    %v197 = vmax.f32 %v195, %v196
    %v198 = vld [vmem:[%s0 + $0x24] sm:$0xf]
    %v199 = vmax.f32 %v197, %v198
    %v200 = vld [vmem:[%s0 + $0x34] sm:$0xf]
    %v201 = vmax.f32 %v199, %v200
    %v202 = vsel %vm186, %v201, -inf
    %v203 = vrot.slane %v202, 4
    %v204 = vmax.f32 %v202, %v203
    %v205 = vrot.slane %v204, 2
    %v206 = vmax.f32 %v204, %v205
    %v207 = vrot.slane %v206, 1
    %v208 = vmax.f32 %v206, %v207
    %209 = vst.msk [vmem:[%s3 + $0x1] sm:$0x1] %vm85, %v208
    %v210 = vld [vmem:[%s0 + $0x8] sm:$0xf]
    %v211 = vld [vmem:[%s0 + $0x18] sm:$0xf]
    %v212 = vmax.f32 %v210, %v211
    %v213 = vld [vmem:[%s0 + $0x28] sm:$0xf]
    %v214 = vmax.f32 %v212, %v213
    %v215 = vld [vmem:[%s0 + $0x38] sm:$0xf]
    %v216 = vmax.f32 %v214, %v215
    %v217 = vsel %vm186, %v216, -inf
    %v218 = vrot.slane %v217, 4
    %v219 = vmax.f32 %v217, %v218
    %v220 = vrot.slane %v219, 2
    %v221 = vmax.f32 %v219, %v220
    %v222 = vrot.slane %v221, 1
    %v223 = vmax.f32 %v221, %v222
    %224 = vst.msk [vmem:[%s3 + $0x2] sm:$0x1] %vm85, %v223
    %v225 = vld [vmem:[%s0 + $0xc] sm:$0xf]
    %v226 = vld [vmem:[%s0 + $0x1c] sm:$0xf]
    %v227 = vmax.f32 %v225, %v226
    %v228 = vld [vmem:[%s0 + $0x2c] sm:$0xf]
    %v229 = vmax.f32 %v227, %v228
    %v230 = vld [vmem:[%s0 + $0x3c] sm:$0xf]
    %v231 = vmax.f32 %v229, %v230
    %v232 = vsel %vm186, %v231, -inf
    %v233 = vrot.slane %v232, 4
    %v234 = vmax.f32 %v232, %v233
    %v235 = vrot.slane %v234, 2
    %v236 = vmax.f32 %v234, %v235
    %v237 = vrot.slane %v236, 1
    %v238 = vmax.f32 %v236, %v237
    %239 = vst.msk [vmem:[%s3 + $0x3] sm:$0x1] %vm85, %v238
    %v240 = vld [vmem:[%s0 + $0x40] sm:$0xf]
    %v241 = vld [vmem:[%s0 + $0x50] sm:$0xf]
    %v242 = vmax.f32 %v240, %v241
    %v243 = vld [vmem:[%s0 + $0x60] sm:$0xf]
    %v244 = vmax.f32 %v242, %v243
    %v245 = vld [vmem:[%s0 + $0x70] sm:$0xf]
    %v246 = vmax.f32 %v244, %v245
    %v247 = vsel %vm186, %v246, -inf
    %v248 = vrot.slane %v247, 4
    %v249 = vmax.f32 %v247, %v248
    %v250 = vrot.slane %v249, 2
    %v251 = vmax.f32 %v249, %v250
    %v252 = vrot.slane %v251, 1
    %v253 = vmax.f32 %v251, %v252
    %254 = vst.msk [vmem:[%s3 + $0x4] sm:$0x1] %vm85, %v253
    %v255 = vld [vmem:[%s0 + $0x44] sm:$0xf]
    %v256 = vld [vmem:[%s0 + $0x54] sm:$0xf]
    %v257 = vmax.f32 %v255, %v256
    %v258 = vld [vmem:[%s0 + $0x64] sm:$0xf]
    %v259 = vmax.f32 %v257, %v258
    %v260 = vld [vmem:[%s0 + $0x74] sm:$0xf]
    %v261 = vmax.f32 %v259, %v260
    %v262 = vsel %vm186, %v261, -inf
    %v263 = vrot.slane %v262, 4
    %v264 = vmax.f32 %v262, %v263
    %v265 = vrot.slane %v264, 2
    %v266 = vmax.f32 %v264, %v265
    %v267 = vrot.slane %v266, 1
    %v268 = vmax.f32 %v266, %v267
    %269 = vst.msk [vmem:[%s3 + $0x5] sm:$0x1] %vm85, %v268
    %v270 = vld [vmem:[%s0 + $0x48] sm:$0xf]
    %v271 = vld [vmem:[%s0 + $0x58] sm:$0xf]
    %v272 = vmax.f32 %v270, %v271
    %v273 = vld [vmem:[%s0 + $0x68] sm:$0xf]
    %v274 = vmax.f32 %v272, %v273
    %v275 = vld [vmem:[%s0 + $0x78] sm:$0xf]
    %v276 = vmax.f32 %v274, %v275
    %v277 = vsel %vm186, %v276, -inf
    %v278 = vrot.slane %v277, 4
    %v279 = vmax.f32 %v277, %v278
    %v280 = vrot.slane %v279, 2
    %v281 = vmax.f32 %v279, %v280
    %v282 = vrot.slane %v281, 1
    %v283 = vmax.f32 %v281, %v282
    %284 = vst.msk [vmem:[%s3 + $0x6] sm:$0x1] %vm85, %v283
    %v285 = vld [vmem:[%s0 + $0x4c] sm:$0xf]
    %v286 = vld [vmem:[%s0 + $0x5c] sm:$0xf]
    %v287 = vmax.f32 %v285, %v286
    %v288 = vld [vmem:[%s0 + $0x6c] sm:$0xf]
    %v289 = vmax.f32 %v287, %v288
    %v290 = vld [vmem:[%s0 + $0x7c] sm:$0xf]
    %v291 = vmax.f32 %v289, %v290
    %v292 = vsel %vm186, %v291, -inf
    %v293 = vrot.slane %v292, 4
    %v294 = vmax.f32 %v292, %v293
    %v295 = vrot.slane %v294, 2
    %v296 = vmax.f32 %v294, %v295
    %v297 = vrot.slane %v296, 1
    %v298 = vmax.f32 %v296, %v297
    %299 = vst.msk [vmem:[%s3 + $0x7] sm:$0x1] %vm85, %v298
    %v300 = vld [vmem:[%s0 + $0x80] sm:$0xf]
    %v301 = vld [vmem:[%s0 + $0x90] sm:$0xf]
    %v302 = vmax.f32 %v300, %v301
    %v303 = vld [vmem:[%s0 + $0xa0] sm:$0xf]
    %v304 = vmax.f32 %v302, %v303
    %v305 = vld [vmem:[%s0 + $0xb0] sm:$0xf]
    %v306 = vmax.f32 %v304, %v305
    %v307 = vsel %vm186, %v306, -inf
    %v308 = vrot.slane %v307, 4
    %v309 = vmax.f32 %v307, %v308
    %v310 = vrot.slane %v309, 2
    %v311 = vmax.f32 %v309, %v310
    %v312 = vrot.slane %v311, 1
    %v313 = vmax.f32 %v311, %v312
    %314 = vst.msk [vmem:[%s3 + $0x8] sm:$0x1] %vm85, %v313
    %v315 = vld [vmem:[%s0 + $0x84] sm:$0xf]
    %v316 = vld [vmem:[%s0 + $0x94] sm:$0xf]
    %v317 = vmax.f32 %v315, %v316
    %v318 = vld [vmem:[%s0 + $0xa4] sm:$0xf]
    %v319 = vmax.f32 %v317, %v318
    %v320 = vld [vmem:[%s0 + $0xb4] sm:$0xf]
    %v321 = vmax.f32 %v319, %v320
    %v322 = vsel %vm186, %v321, -inf
    %v323 = vrot.slane %v322, 4
    %v324 = vmax.f32 %v322, %v323
    %v325 = vrot.slane %v324, 2
    %v326 = vmax.f32 %v324, %v325
    %v327 = vrot.slane %v326, 1
    %v328 = vmax.f32 %v326, %v327
    %329 = vst.msk [vmem:[%s3 + $0x9] sm:$0x1] %vm85, %v328
    %v330 = vld [vmem:[%s0 + $0x88] sm:$0xf]
    %v331 = vld [vmem:[%s0 + $0x98] sm:$0xf]
    %v332 = vmax.f32 %v330, %v331
    %v333 = vld [vmem:[%s0 + $0xa8] sm:$0xf]
    %v334 = vmax.f32 %v332, %v333
    %v335 = vld [vmem:[%s0 + $0xb8] sm:$0xf]
    %v336 = vmax.f32 %v334, %v335
    %v337 = vsel %vm186, %v336, -inf
    %v338 = vrot.slane %v337, 4
    %v339 = vmax.f32 %v337, %v338
    %v340 = vrot.slane %v339, 2
    %v341 = vmax.f32 %v339, %v340
    %v342 = vrot.slane %v341, 1
    %v343 = vmax.f32 %v341, %v342
    %344 = vst.msk [vmem:[%s3 + $0xa] sm:$0x1] %vm85, %v343
    %v345 = vld [vmem:[%s0 + $0x8c] sm:$0xf]
    %v346 = vld [vmem:[%s0 + $0x9c] sm:$0xf]
    %v347 = vmax.f32 %v345, %v346
    %v348 = vld [vmem:[%s0 + $0xac] sm:$0xf]
    %v349 = vmax.f32 %v347, %v348
    %v350 = vld [vmem:[%s0 + $0xbc] sm:$0xf]
    %v351 = vmax.f32 %v349, %v350
    %v352 = vsel %vm186, %v351, -inf
    %v353 = vrot.slane %v352, 4
    %v354 = vmax.f32 %v352, %v353
    %v355 = vrot.slane %v354, 2
    %v356 = vmax.f32 %v354, %v355
    %v357 = vrot.slane %v356, 1
    %v358 = vmax.f32 %v356, %v357
    %359 = vst.msk [vmem:[%s3 + $0xb] sm:$0x1] %vm85, %v358
    %v360 = vld [vmem:[%s0 + $0xc0] sm:$0xf]
    %v361 = vld [vmem:[%s0 + $0xd0] sm:$0xf]
    %v362 = vmax.f32 %v360, %v361
    %v363 = vld [vmem:[%s0 + $0xe0] sm:$0xf]
    %v364 = vmax.f32 %v362, %v363
    %v365 = vld [vmem:[%s0 + $0xf0] sm:$0xf]
    %v366 = vmax.f32 %v364, %v365
    %v367 = vsel %vm186, %v366, -inf
    %v368 = vrot.slane %v367, 4
    %v369 = vmax.f32 %v367, %v368
    %v370 = vrot.slane %v369, 2
    %v371 = vmax.f32 %v369, %v370
    %v372 = vrot.slane %v371, 1
    %v373 = vmax.f32 %v371, %v372
    %374 = vst.msk [vmem:[%s3 + $0xc] sm:$0x1] %vm85, %v373
    %v375 = vld [vmem:[%s0 + $0xc4] sm:$0xf]
    %v376 = vld [vmem:[%s0 + $0xd4] sm:$0xf]
    %v377 = vmax.f32 %v375, %v376
    %v378 = vld [vmem:[%s0 + $0xe4] sm:$0xf]
    %v379 = vmax.f32 %v377, %v378
    %v380 = vld [vmem:[%s0 + $0xf4] sm:$0xf]
    %v381 = vmax.f32 %v379, %v380
    %v382 = vsel %vm186, %v381, -inf
    %v383 = vrot.slane %v382, 4
    %v384 = vmax.f32 %v382, %v383
    %v385 = vrot.slane %v384, 2
    %v386 = vmax.f32 %v384, %v385
    %v387 = vrot.slane %v386, 1
    %v388 = vmax.f32 %v386, %v387
    %389 = vst.msk [vmem:[%s3 + $0xd] sm:$0x1] %vm85, %v388
    %v390 = vld [vmem:[%s0 + $0xc8] sm:$0xf]
    %v391 = vld [vmem:[%s0 + $0xd8] sm:$0xf]
    %v392 = vmax.f32 %v390, %v391
    %v393 = vld [vmem:[%s0 + $0xe8] sm:$0xf]
    %v394 = vmax.f32 %v392, %v393
    %v395 = vld [vmem:[%s0 + $0xf8] sm:$0xf]
    %v396 = vmax.f32 %v394, %v395
    %v397 = vsel %vm186, %v396, -inf
    %v398 = vrot.slane %v397, 4
    %v399 = vmax.f32 %v397, %v398
    %v400 = vrot.slane %v399, 2
    %v401 = vmax.f32 %v399, %v400
    %v402 = vrot.slane %v401, 1
    %v403 = vmax.f32 %v401, %v402
    %404 = vst.msk [vmem:[%s3 + $0xe] sm:$0x1] %vm85, %v403
    %v405 = vld [vmem:[%s0 + $0xcc] sm:$0xf]
    %v406 = vld [vmem:[%s0 + $0xdc] sm:$0xf]
    %v407 = vmax.f32 %v405, %v406
    %v408 = vld [vmem:[%s0 + $0xec] sm:$0xf]
    %v409 = vmax.f32 %v407, %v408
    %v410 = vld [vmem:[%s0 + $0xfc] sm:$0xf]
    %v411 = vmax.f32 %v409, %v410
    %v412 = vsel %vm186, %v411, -inf
    %v413 = vrot.slane %v412, 4
    %v414 = vmax.f32 %v412, %v413
    %v415 = vrot.slane %v414, 2
    %v416 = vmax.f32 %v414, %v415
    %v417 = vrot.slane %v416, 1
    %v418 = vmax.f32 %v416, %v417
    %419 = vst.msk [vmem:[%s3 + $0xf] sm:$0x1] %vm85, %v418
    // Predicated region
    $region6: #{tpu_custom_call.1} parent=1 // pred_check
      _
    $region7: #{tpu_custom_call.1} parent=1 // pred_check_branch
      %421 = sbr.rel (0) target = $region9
    $region8: #{tpu_custom_call.1} parent=1 // pred_region
      %s423 = ssub.s32 16, 16
      %424 = vsyncadd [#allocation3], %s423
      %s426 = sshll.u32 [#allocation2], 4
      %s427 = int_to_ptr.vmem [resolvable:$true] %s426
      %429 = dma.vmem_to_hbm [thread:$0]  %s427, 16, %s1, [#allocation3]
    $region9: #{tpu_custom_call.1} parent=1 // pred_fallthru
      _
    // Predicated region
    $region10: #{tpu_custom_call.1} parent=1 // pred_check
      _
    $region11: #{tpu_custom_call.1} parent=1 // pred_check_branch
      %431 = sbr.rel (0) target = $region13
    $region12: #{tpu_custom_call.1} parent=1 // pred_region
      %s433 = ssub.s32 64, 64
      %434 = vsyncadd [#allocation5], %s433
      %s436 = sshll.u32 [#allocation4], 4
      %s437 = int_to_ptr.vmem [resolvable:$true] %s436
      %439 = dma.vmem_to_hbm [thread:$0]  %s437, 64, %s2, [#allocation5]
    $region13: #{tpu_custom_call.1} parent=1 // pred_fallthru
      _
    // Predicated region
    $region14: #{tpu_custom_call.1} parent=1 // pred_check
      _
    $region15: #{tpu_custom_call.1} parent=1 // pred_check_branch
      %441 = sbr.rel (0) target = $region17
    $region16: #{tpu_custom_call.1} parent=1 // pred_region
      _
    $region17: #{tpu_custom_call.1} parent=1 // pred_fallthru
      _
    // Predicated region
    $region18: #{tpu_custom_call.1} parent=1 // pred_check
      _
    $region19: #{tpu_custom_call.1} parent=1 // pred_check_branch
      %443 = sbr.rel (0) target = $region21
    $region20: #{tpu_custom_call.1} parent=1 // pred_region
      %444 = dma.done [#allocation3], 16
    $region21: #{tpu_custom_call.1} parent=1 // pred_fallthru
      _
    // Predicated region
    $region22: #{tpu_custom_call.1} parent=1 // pred_check
      _
    $region23: #{tpu_custom_call.1} parent=1 // pred_check_branch
      %446 = sbr.rel (0) target = $region25
    $region24: #{tpu_custom_call.1} parent=1 // pred_region
      %447 = dma.done [#allocation5], 64
    $region25: #{tpu_custom_call.1} parent=1 // pred_fallthru
      _
    // Predicated region
    $region26: #{tpu_custom_call.1} parent=1 // pred_check
      _
    $region27: #{tpu_custom_call.1} parent=1 // pred_check_branch
      %449 = sbr.rel (0) target = $region29
    $region28: #{tpu_custom_call.1} parent=1 // pred_region
      _
    $region29: #{tpu_custom_call.1} parent=1 // pred_fallthru
      _
    %450 = vsyncpa [#allocation3], 1
    %451 = vsyncpa [#allocation5], 1

</llo_original>
